<compile_context>
chip_gen: v5e
topology: v5e:2x2
jax: 0.10.0
libtpu: 0.0.40
codegen_flags: <defaults>
</compile_context>

<pallas_src>
import functools

import jax
import jax.numpy as jnp
import numpy as np
from jax.experimental import pallas as pl
from jax.experimental.pallas import tpu as pltpu

_WPAD = 8  # aligned (multiple-of-8) sublane padding used by the conv scratch


# -----------------------------------------------------------------------------
# Kernel 1: warped-feature cost volume, emitted directly in NDHWC.
#   cost[n,d,h,w,c] = left[n,h,w,c] * right[n,h,clamp(w-d,0,D-1),c] * (w >= d)
# (the clamp upper bound D-1 reproduces the original module exactly)
# The W-shift is realized by staging `right` into a zero-left-padded VMEM
# scratch (aligned store) and taking static sublane-offset slices per d.
# -----------------------------------------------------------------------------
def _cost_volume_kernel(l_ref, r_ref, o_ref, rp_ref, *, D, W, C, PADL):
    left = l_ref[0]                               # (tH, W, C)
    right = r_ref[0]                              # (tH, W, C)
    tH = left.shape[0]

    rp_ref[...] = jnp.zeros((tH, W + PADL, C), jnp.float32)
    rp_ref[:, PADL:PADL + W, :] = right           # aligned store (PADL % 8 == 0)
    rp = rp_ref[...]                              # (tH, W + PADL, C)

    # Hoisted out of the d loop: iota, clamp column product.
    w_iota = jax.lax.broadcasted_iota(jnp.int32, (tH, W, C), 1)
    left_clamp = left * jnp.broadcast_to(right[:, D - 1:D, :], (tH, W, C))

    for d in range(D):
        shifted = rp[:, PADL - d:PADL - d + W, :]   # right[:, w - d, :] (0 for w < d)
        vals = jnp.where(w_iota - d >= D, left_clamp, left * shifted)
        o_ref[0, d] = jnp.where(w_iota >= d, vals, 0.0)   # full aligned store


def cost_volume(left_nhwc, right_nhwc, max_disp, tile_h):
    N, H, W, C = left_nhwc.shape
    D = max_disp
    padl = ((max(D - 1, 0) + 7) // 8) * 8
    kern = functools.partial(_cost_volume_kernel, D=D, W=W, C=C, PADL=padl)
    return pl.pallas_call(
        kern,
        out_shape=jax.ShapeDtypeStruct((N, D, H, W, C), jnp.float32),
        grid=(N, H // tile_h),
        in_specs=[
            pl.BlockSpec((1, tile_h, W, C), lambda n, h: (n, h, 0, 0)),
            pl.BlockSpec((1, tile_h, W, C), lambda n, h: (n, h, 0, 0)),
        ],
        out_specs=pl.BlockSpec((1, D, tile_h, W, C),
                               lambda n, h: (n, 0, h, 0, 0)),
        scratch_shapes=[pltpu.VMEM((tile_h, W + padl, C), jnp.float32)],
        compiler_params=pltpu.CompilerParams(
            dimension_semantics=("parallel", "parallel")),
    )(left_nhwc, right_nhwc)


# -----------------------------------------------------------------------------
# Kernel 2: Conv3d(3x3x3, stride 1, pad 1) + folded BatchNorm3d (+ ReLU).
# Padding is done in-kernel into a VMEM scratch; the 27 taps are packed into a
# single (D*H*W, 27*Ci) im2col patch matrix and contracted with one matmul.
# BN scale is pre-folded into the weights; only the shift is added here.
# -----------------------------------------------------------------------------
def _conv3d_bn_kernel(x_ref, w_ref, b_ref, o_ref, xp_ref, pat_ref, *,
                      D, H, W, Ci, Co, relu):
    # In-kernel zero padding; interior placed at an aligned sublane offset.
    xp_ref[...] = jnp.zeros((D + 2, H + 2, W + 2 * _WPAD, Ci), jnp.float32)
    xp_ref[1:D + 1, 1:H + 1, _WPAD:_WPAD + W, :] = x_ref[0]
    xp = xp_ref[...]                              # (D+2, H+2, W+2*_WPAD, Ci)

    # im2col: the whole conv becomes one K = 27*Ci matmul on the MXU.
    k = 0
    for kd in range(3):
        for kh in range(3):
            for kw in range(3):
                xs = xp[kd:kd + D, kh:kh + H,
                        _WPAD - 1 + kw:_WPAD - 1 + kw + W, :]
                pat_ref[:, k * Ci:(k + 1) * Ci] = xs.reshape(D * H * W, Ci)
                k += 1

    y = jnp.dot(pat_ref[...], w_ref[...], preferred_element_type=jnp.float32)
    y = y + b_ref[...]                            # BN scale folded into w
    if relu:
        y = jnp.maximum(y, 0.0)
    o_ref[0] = y.reshape(D, H, W, Co)


def conv3d_bn(x, w_flat, shift, relu):
    # x: (N, D, H, W, Ci); w_flat: (27*Ci, Co) with BN scale folded in;
    # shift: (1, Co) = folded conv-bias + BN shift.
    N, D, H, W, Ci = x.shape
    Co = w_flat.shape[-1]
    kern = functools.partial(_conv3d_bn_kernel,
                             D=D, H=H, W=W, Ci=Ci, Co=Co, relu=relu)
    # TODO(synk): for realistic stereo sizes, add a D-tile grid axis with a
    # 2-slab halo (manual DMA) so the working set fits v7x's 64 MiB VMEM;
    # whole-volume-per-batch blocks are fine at this toy size.
    return pl.pallas_call(
        kern,
        out_shape=jax.ShapeDtypeStruct((N, D, H, W, Co), jnp.float32),
        grid=(N,),
        in_specs=[
            pl.BlockSpec((1, D, H, W, Ci), lambda n: (n, 0, 0, 0, 0)),
            pl.BlockSpec((27 * Ci, Co), lambda n: (0, 0)),
            pl.BlockSpec((1, Co), lambda n: (0, 0)),
        ],
        out_specs=pl.BlockSpec((1, D, H, W, Co), lambda n: (n, 0, 0, 0, 0)),
        scratch_shapes=[
            pltpu.VMEM((D + 2, H + 2, W + 2 * _WPAD, Ci), jnp.float32),
            pltpu.VMEM((D * H * W, 27 * Ci), jnp.float32),
        ],
        compiler_params=pltpu.CompilerParams(
            dimension_semantics=("parallel",),
            vmem_limit_bytes=32 * 1024 * 1024),
    )(x, w_flat, shift)


# -----------------------------------------------------------------------------
# Kernel 3: softmax over disparity + soft-argmax (single fused weighted sum).
# -----------------------------------------------------------------------------
def _softargmax_kernel(v_ref, o_ref):
    v = v_ref[0]                                  # (D, tH, W)
    m = jnp.max(v, axis=0, keepdims=True)
    e = jnp.exp(v - m)
    s = jnp.sum(e, axis=0)                        # (tH, W)
    d_idx = jax.lax.broadcasted_iota(jnp.int32, v.shape, 0).astype(jnp.float32)
    num = jnp.sum(e * d_idx, axis=0)              # disparity-weighted sum, 1 pass
    # approx=False keeps the softmax normalization exact for the tolerance check.
    o_ref[0] = num * pl.reciprocal(s, approx=False)


def soft_argmax(vol, tile_h):
    N, D, H, W = vol.shape
    return pl.pallas_call(
        _softargmax_kernel,
        out_shape=jax.ShapeDtypeStruct((N, H, W), jnp.float32),
        grid=(N, H // tile_h),
        in_specs=[pl.BlockSpec((1, D, tile_h, W), lambda n, h: (n, 0, h, 0))],
        out_specs=pl.BlockSpec((1, tile_h, W), lambda n, h: (n, h, 0)),
        compiler_params=pltpu.CompilerParams(
            dimension_semantics=("parallel", "parallel")),
    )(vol)


# -----------------------------------------------------------------------------
# Full CostVolume.forward
# -----------------------------------------------------------------------------
def cost_volume_forward(left, right, params, max_disp):
    N, C, H, W = left.shape
    tile_h = 8 if H % 8 == 0 else H
    # One cheap NCHW->NHWC transpose of the 2-D feature maps; everything
    # downstream stays channels-last (no full-volume transpose).
    left_nhwc = jnp.transpose(left, (0, 2, 3, 1))
    right_nhwc = jnp.transpose(right, (0, 2, 3, 1))
    x = cost_volume(left_nhwc, right_nhwc, max_disp, tile_h)   # (N, D, H, W, C)
    for (w, scale, shift, relu) in params:
        ci, co = w.shape[3], w.shape[4]
        w_folded = (w * scale).reshape(27 * ci, co)            # fold BN scale
        x = conv3d_bn(x, w_folded, shift.reshape(1, co), relu)
    # Last layer has Co=1; dropping the trailing 1 is a free (contiguous) reshape.
    # TODO(synk): the final Co=1 layer still issues lane-width-1 stores.
    vol = x.reshape(x.shape[:-1])                              # (N, D, H, W)
    return soft_argmax(vol, tile_h)                            # (N, H, W)


# -----------------------------------------------------------------------------
# Deterministic parameter init (Conv3d weight/bias + eval-mode BN).
# Weight layout is (kd, kh, kw, Ci, Co) = DHWIO.
# -----------------------------------------------------------------------------
def init_params(key, in_chan, num_layers=8, eps=1e-5):
    params = []
    for i in range(num_layers):
        ci = in_chan
        co = in_chan if i < num_layers - 1 else 1
        relu = i < num_layers - 1                   # last block: activate=False
        key, k1, k2, k3, k4, k5, k6 = jax.random.split(key, 7)
        fan_in = ci * 27
        w = jax.random.normal(k1, (3, 3, 3, ci, co), jnp.float32) * (2.0 / fan_in) ** 0.5
        b = 0.1 * jax.random.normal(k2, (co,), jnp.float32)
        gamma = 1.0 + 0.1 * jax.random.normal(k3, (co,), jnp.float32)
        beta = 0.1 * jax.random.normal(k4, (co,), jnp.float32)
        mean = 0.1 * jax.random.normal(k5, (co,), jnp.float32)
        var = 1.0 + 0.1 * jax.random.uniform(k6, (co,), jnp.float32)
        eff_scale = gamma / jnp.sqrt(var + eps)     # BN (eval) folded with conv bias
        eff_shift = (b - mean) * eff_scale + beta
        params.append((w, eff_scale, eff_shift, relu))
    return params


# -----------------------------------------------------------------------------
# Pure-JAX reference (same math) for a correctness check.
# -----------------------------------------------------------------------------
def reference_forward(left, right, params, max_disp):
    N, C, H, W = left.shape
    D = max_disp
    d = jnp.arange(D)
    wv = jnp.arange(W)
    idx = jnp.clip(wv[None, :] - d[:, None], 0, D - 1)          # (D, W)
    mask = (wv[None, :] >= d[:, None]).astype(jnp.float32)      # (D, W)
    gathered = right[:, :, :, idx]                               # (N, C, H, D, W)
    gathered = jnp.transpose(gathered, (0, 1, 3, 2, 4))          # (N, C, D, H, W)
    cost = left[:, :, None] * gathered * mask[None, None, :, None, :]
    x = jnp.transpose(cost, (0, 2, 3, 4, 1))                     # NDHWC
    for (wk, scale, shift, relu) in params:
        y = jax.lax.conv_general_dilated(
            x, wk, window_strides=(1, 1, 1), padding=((1, 1),) * 3,
            dimension_numbers=("NDHWC", "DHWIO", "NDHWC"))
        x = y * scale + shift
        if relu:
            x = jnp.maximum(x, 0.0)
    vol = x[..., 0]
    p = jax.nn.softmax(vol, axis=1)
    disp = jnp.arange(D, dtype=jnp.float32)[None, :, None, None]
    return jnp.sum(p * disp, axis=1)


if __name__ == "__main__":
    key = jax.random.PRNGKey(0)
    k_left, k_right, k_param = jax.random.split(key, 3)

    N, C, H, W = 2, 4, 16, 16     # batch, in_chan, height, width
    max_disp = 8

    left = jax.random.normal(k_left, (N, C, H, W), jnp.float32)
    right = jax.random.normal(k_right, (N, C, H, W), jnp.float32)
    params = init_params(k_param, C)

    out = cost_volume_forward(left, right, params, max_disp)
    out = jax.block_until_ready(out)
    assert out.shape == (N, H, W)

    ref = reference_forward(left, right, params, max_disp)
    np.testing.assert_allclose(np.asarray(out), np.asarray(ref),
                               rtol=1e-3, atol=2e-3)
    print("KERNEL_OK")
</pallas_src>

<mosaic_0001>
module attributes {stable_mosaic.version = 11 : i64} {
  func.func @_cost_volume_kernel(%arg0: i32, %arg1: i32, %arg2: memref<1x8x16x4xf32, #tpu.memory_space<vmem>>, %arg3: memref<1x8x16x4xf32, #tpu.memory_space<vmem>>, %arg4: memref<1x8x8x16x4xf32, #tpu.memory_space<vmem>>, %arg5: memref<8x24x4xf32, #tpu.memory_space<vmem>>) attributes {dimension_semantics = [#tpu.dimension_semantics<parallel>, #tpu.dimension_semantics<parallel>], iteration_bounds = array<i64: 2, 2>, scalar_prefetch = 0 : i64, scratch_operands = 1 : i64, tpu.core_type = #tpu.core_type<tc>, window_params = [{transform_indices = @transform_0, window_bounds = array<i64: 1, 8, 16, 4>}, {transform_indices = @transform_1, window_bounds = array<i64: 1, 8, 16, 4>}, {transform_indices = @transform_2, window_bounds = array<i64: 1, 8, 8, 16, 4>}]} {
    %c0 = arith.constant 0 : index
    %c0_0 = arith.constant 0 : index
    %c0_1 = arith.constant 0 : index
    %c0_2 = arith.constant 0 : index
    %0 = vector.load %arg2[%c0, %c0_0, %c0_1, %c0_2] : memref<1x8x16x4xf32, #tpu.memory_space<vmem>>, vector<1x8x16x4xf32>
    %1 = vector.shape_cast %0 : vector<1x8x16x4xf32> to vector<8x16x4xf32>
    %c0_3 = arith.constant 0 : index
    %c0_4 = arith.constant 0 : index
    %c0_5 = arith.constant 0 : index
    %c0_6 = arith.constant 0 : index
    %2 = vector.load %arg3[%c0_3, %c0_4, %c0_5, %c0_6] : memref<1x8x16x4xf32, #tpu.memory_space<vmem>>, vector<1x8x16x4xf32>
    %3 = vector.shape_cast %2 : vector<1x8x16x4xf32> to vector<8x16x4xf32>
    %cst = arith.constant 0.000000e+00 : f32
    %4 = vector.broadcast %cst : f32 to vector<8x24x4xf32>
    %c0_7 = arith.constant 0 : index
    %c0_8 = arith.constant 0 : index
    %c0_9 = arith.constant 0 : index
    %5 = vector.load %arg5[%c0_7, %c0_8, %c0_9] : memref<8x24x4xf32, #tpu.memory_space<vmem>>, vector<8x24x4xf32>
    tpu.vector_store %arg5[%c0_7, %c0_8, %c0_9], %4 {strides = array<i32>} : memref<8x24x4xf32, #tpu.memory_space<vmem>>, vector<8x24x4xf32>,
    %c0_10 = arith.constant 0 : index
    %c8 = arith.constant 8 : index
    %c0_11 = arith.constant 0 : index
    %6 = vector.load %arg5[%c0_10, %c8, %c0_11] : memref<8x24x4xf32, #tpu.memory_space<vmem>>, vector<8x16x4xf32>
    tpu.vector_store %arg5[%c0_10, %c8, %c0_11], %3 {strides = array<i32>} : memref<8x24x4xf32, #tpu.memory_space<vmem>>, vector<8x16x4xf32>,
    %c0_12 = arith.constant 0 : index
    %c0_13 = arith.constant 0 : index
    %c0_14 = arith.constant 0 : index
    %7 = vector.load %arg5[%c0_12, %c0_13, %c0_14] : memref<8x24x4xf32, #tpu.memory_space<vmem>>, vector<8x24x4xf32>
    %8 = tpu.iota {dimensions = array<i32: 1>} : vector<8x16x4xi32>
    %9 = vector.extract_strided_slice %3 {offsets = [0, 7, 0], sizes = [8, 1, 4], strides = [1, 1, 1]} : vector<8x16x4xf32> to vector<8x1x4xf32>
    %10 = vector.shape_cast %9 : vector<8x1x4xf32> to vector<8x1x4xf32>
    %11 = vector.broadcast %10 : vector<8x1x4xf32> to vector<8x16x4xf32>
    %12 = arith.mulf %1, %11 : vector<8x16x4xf32>
    %13 = vector.extract_strided_slice %7 {offsets = [0, 8, 0], sizes = [8, 16, 4], strides = [1, 1, 1]} : vector<8x24x4xf32> to vector<8x16x4xf32>
    %c0_i32 = arith.constant 0 : i32
    %14 = vector.broadcast %c0_i32 : i32 to vector<8x16x4xi32>
    %15 = arith.subi %8, %14 : vector<8x16x4xi32>
    %c8_i32 = arith.constant 8 : i32
    %16 = vector.broadcast %c8_i32 : i32 to vector<8x16x4xi32>
    %17 = arith.cmpi sge, %15, %16 : vector<8x16x4xi32>
    %18 = arith.mulf %1, %13 : vector<8x16x4xf32>
    %19 = arith.select %17, %12, %18 : vector<8x16x4xi1>, vector<8x16x4xf32>
    %c0_i32_15 = arith.constant 0 : i32
    %20 = vector.broadcast %c0_i32_15 : i32 to vector<8x16x4xi32>
    %21 = arith.cmpi sge, %8, %20 : vector<8x16x4xi32>
    %cst_16 = arith.constant 0.000000e+00 : f32
    %22 = vector.broadcast %cst_16 : f32 to vector<8x16x4xf32>
    %23 = arith.select %21, %19, %22 : vector<8x16x4xi1>, vector<8x16x4xf32>
    %c0_17 = arith.constant 0 : index
    %c0_18 = arith.constant 0 : index
    %c0_19 = arith.constant 0 : index
    %c0_20 = arith.constant 0 : index
    %c0_21 = arith.constant 0 : index
    %24 = vector.load %arg4[%c0_17, %c0_18, %c0_19, %c0_20, %c0_21] : memref<1x8x8x16x4xf32, #tpu.memory_space<vmem>>, vector<1x1x8x16x4xf32>
    %25 = vector.shape_cast %24 : vector<1x1x8x16x4xf32> to vector<8x16x4xf32>
    %26 = vector.shape_cast %23 : vector<8x16x4xf32> to vector<1x1x8x16x4xf32>
    tpu.vector_store %arg4[%c0_17, %c0_18, %c0_19, %c0_20, %c0_21], %26 {strides = array<i32>} : memref<1x8x8x16x4xf32, #tpu.memory_space<vmem>>, vector<1x1x8x16x4xf32>,
    %27 = vector.extract_strided_slice %7 {offsets = [0, 7, 0], sizes = [8, 16, 4], strides = [1, 1, 1]} : vector<8x24x4xf32> to vector<8x16x4xf32>
    %c1_i32 = arith.constant 1 : i32
    %28 = vector.broadcast %c1_i32 : i32 to vector<8x16x4xi32>
    %29 = arith.subi %8, %28 : vector<8x16x4xi32>
    %c8_i32_22 = arith.constant 8 : i32
    %30 = vector.broadcast %c8_i32_22 : i32 to vector<8x16x4xi32>
    %31 = arith.cmpi sge, %29, %30 : vector<8x16x4xi32>
    %32 = arith.mulf %1, %27 : vector<8x16x4xf32>
    %33 = arith.select %31, %12, %32 : vector<8x16x4xi1>, vector<8x16x4xf32>
    %c1_i32_23 = arith.constant 1 : i32
    %34 = vector.broadcast %c1_i32_23 : i32 to vector<8x16x4xi32>
    %35 = arith.cmpi sge, %8, %34 : vector<8x16x4xi32>
    %cst_24 = arith.constant 0.000000e+00 : f32
    %36 = vector.broadcast %cst_24 : f32 to vector<8x16x4xf32>
    %37 = arith.select %35, %33, %36 : vector<8x16x4xi1>, vector<8x16x4xf32>
    %c0_25 = arith.constant 0 : index
    %c1 = arith.constant 1 : index
    %c0_26 = arith.constant 0 : index
    %c0_27 = arith.constant 0 : index
    %c0_28 = arith.constant 0 : index
    %38 = vector.load %arg4[%c0_25, %c1, %c0_26, %c0_27, %c0_28] : memref<1x8x8x16x4xf32, #tpu.memory_space<vmem>>, vector<1x1x8x16x4xf32>
    %39 = vector.shape_cast %38 : vector<1x1x8x16x4xf32> to vector<8x16x4xf32>
    %40 = vector.shape_cast %37 : vector<8x16x4xf32> to vector<1x1x8x16x4xf32>
    tpu.vector_store %arg4[%c0_25, %c1, %c0_26, %c0_27, %c0_28], %40 {strides = array<i32>} : memref<1x8x8x16x4xf32, #tpu.memory_space<vmem>>, vector<1x1x8x16x4xf32>,
    %41 = vector.extract_strided_slice %7 {offsets = [0, 6, 0], sizes = [8, 16, 4], strides = [1, 1, 1]} : vector<8x24x4xf32> to vector<8x16x4xf32>
    %c2_i32 = arith.constant 2 : i32
    %42 = vector.broadcast %c2_i32 : i32 to vector<8x16x4xi32>
    %43 = arith.subi %8, %42 : vector<8x16x4xi32>
    %c8_i32_29 = arith.constant 8 : i32
    %44 = vector.broadcast %c8_i32_29 : i32 to vector<8x16x4xi32>
    %45 = arith.cmpi sge, %43, %44 : vector<8x16x4xi32>
    %46 = arith.mulf %1, %41 : vector<8x16x4xf32>
    %47 = arith.select %45, %12, %46 : vector<8x16x4xi1>, vector<8x16x4xf32>
    %c2_i32_30 = arith.constant 2 : i32
    %48 = vector.broadcast %c2_i32_30 : i32 to vector<8x16x4xi32>
    %49 = arith.cmpi sge, %8, %48 : vector<8x16x4xi32>
    %cst_31 = arith.constant 0.000000e+00 : f32
    %50 = vector.broadcast %cst_31 : f32 to vector<8x16x4xf32>
    %51 = arith.select %49, %47, %50 : vector<8x16x4xi1>, vector<8x16x4xf32>
    %c0_32 = arith.constant 0 : index
    %c2 = arith.constant 2 : index
    %c0_33 = arith.constant 0 : index
    %c0_34 = arith.constant 0 : index
    %c0_35 = arith.constant 0 : index
    %52 = vector.load %arg4[%c0_32, %c2, %c0_33, %c0_34, %c0_35] : memref<1x8x8x16x4xf32, #tpu.memory_space<vmem>>, vector<1x1x8x16x4xf32>
    %53 = vector.shape_cast %52 : vector<1x1x8x16x4xf32> to vector<8x16x4xf32>
    %54 = vector.shape_cast %51 : vector<8x16x4xf32> to vector<1x1x8x16x4xf32>
    tpu.vector_store %arg4[%c0_32, %c2, %c0_33, %c0_34, %c0_35], %54 {strides = array<i32>} : memref<1x8x8x16x4xf32, #tpu.memory_space<vmem>>, vector<1x1x8x16x4xf32>,
    %55 = vector.extract_strided_slice %7 {offsets = [0, 5, 0], sizes = [8, 16, 4], strides = [1, 1, 1]} : vector<8x24x4xf32> to vector<8x16x4xf32>
    %c3_i32 = arith.constant 3 : i32
    %56 = vector.broadcast %c3_i32 : i32 to vector<8x16x4xi32>
    %57 = arith.subi %8, %56 : vector<8x16x4xi32>
    %c8_i32_36 = arith.constant 8 : i32
    %58 = vector.broadcast %c8_i32_36 : i32 to vector<8x16x4xi32>
    %59 = arith.cmpi sge, %57, %58 : vector<8x16x4xi32>
    %60 = arith.mulf %1, %55 : vector<8x16x4xf32>
    %61 = arith.select %59, %12, %60 : vector<8x16x4xi1>, vector<8x16x4xf32>
    %c3_i32_37 = arith.constant 3 : i32
    %62 = vector.broadcast %c3_i32_37 : i32 to vector<8x16x4xi32>
    %63 = arith.cmpi sge, %8, %62 : vector<8x16x4xi32>
    %cst_38 = arith.constant 0.000000e+00 : f32
    %64 = vector.broadcast %cst_38 : f32 to vector<8x16x4xf32>
    %65 = arith.select %63, %61, %64 : vector<8x16x4xi1>, vector<8x16x4xf32>
    %c0_39 = arith.constant 0 : index
    %c3 = arith.constant 3 : index
    %c0_40 = arith.constant 0 : index
    %c0_41 = arith.constant 0 : index
    %c0_42 = arith.constant 0 : index
    %66 = vector.load %arg4[%c0_39, %c3, %c0_40, %c0_41, %c0_42] : memref<1x8x8x16x4xf32, #tpu.memory_space<vmem>>, vector<1x1x8x16x4xf32>
    %67 = vector.shape_cast %66 : vector<1x1x8x16x4xf32> to vector<8x16x4xf32>
    %68 = vector.shape_cast %65 : vector<8x16x4xf32> to vector<1x1x8x16x4xf32>
    tpu.vector_store %arg4[%c0_39, %c3, %c0_40, %c0_41, %c0_42], %68 {strides = array<i32>} : memref<1x8x8x16x4xf32, #tpu.memory_space<vmem>>, vector<1x1x8x16x4xf32>,
    %69 = vector.extract_strided_slice %7 {offsets = [0, 4, 0], sizes = [8, 16, 4], strides = [1, 1, 1]} : vector<8x24x4xf32> to vector<8x16x4xf32>
    %c4_i32 = arith.constant 4 : i32
    %70 = vector.broadcast %c4_i32 : i32 to vector<8x16x4xi32>
    %71 = arith.subi %8, %70 : vector<8x16x4xi32>
    %c8_i32_43 = arith.constant 8 : i32
    %72 = vector.broadcast %c8_i32_43 : i32 to vector<8x16x4xi32>
    %73 = arith.cmpi sge, %71, %72 : vector<8x16x4xi32>
    %74 = arith.mulf %1, %69 : vector<8x16x4xf32>
    %75 = arith.select %73, %12, %74 : vector<8x16x4xi1>, vector<8x16x4xf32>
    %c4_i32_44 = arith.constant 4 : i32
    %76 = vector.broadcast %c4_i32_44 : i32 to vector<8x16x4xi32>
    %77 = arith.cmpi sge, %8, %76 : vector<8x16x4xi32>
    %cst_45 = arith.constant 0.000000e+00 : f32
    %78 = vector.broadcast %cst_45 : f32 to vector<8x16x4xf32>
    %79 = arith.select %77, %75, %78 : vector<8x16x4xi1>, vector<8x16x4xf32>
    %c0_46 = arith.constant 0 : index
    %c4 = arith.constant 4 : index
    %c0_47 = arith.constant 0 : index
    %c0_48 = arith.constant 0 : index
    %c0_49 = arith.constant 0 : index
    %80 = vector.load %arg4[%c0_46, %c4, %c0_47, %c0_48, %c0_49] : memref<1x8x8x16x4xf32, #tpu.memory_space<vmem>>, vector<1x1x8x16x4xf32>
    %81 = vector.shape_cast %80 : vector<1x1x8x16x4xf32> to vector<8x16x4xf32>
    %82 = vector.shape_cast %79 : vector<8x16x4xf32> to vector<1x1x8x16x4xf32>
    tpu.vector_store %arg4[%c0_46, %c4, %c0_47, %c0_48, %c0_49], %82 {strides = array<i32>} : memref<1x8x8x16x4xf32, #tpu.memory_space<vmem>>, vector<1x1x8x16x4xf32>,
    %83 = vector.extract_strided_slice %7 {offsets = [0, 3, 0], sizes = [8, 16, 4], strides = [1, 1, 1]} : vector<8x24x4xf32> to vector<8x16x4xf32>
    %c5_i32 = arith.constant 5 : i32
    %84 = vector.broadcast %c5_i32 : i32 to vector<8x16x4xi32>
    %85 = arith.subi %8, %84 : vector<8x16x4xi32>
    %c8_i32_50 = arith.constant 8 : i32
    %86 = vector.broadcast %c8_i32_50 : i32 to vector<8x16x4xi32>
    %87 = arith.cmpi sge, %85, %86 : vector<8x16x4xi32>
    %88 = arith.mulf %1, %83 : vector<8x16x4xf32>
    %89 = arith.select %87, %12, %88 : vector<8x16x4xi1>, vector<8x16x4xf32>
    %c5_i32_51 = arith.constant 5 : i32
    %90 = vector.broadcast %c5_i32_51 : i32 to vector<8x16x4xi32>
    %91 = arith.cmpi sge, %8, %90 : vector<8x16x4xi32>
    %cst_52 = arith.constant 0.000000e+00 : f32
    %92 = vector.broadcast %cst_52 : f32 to vector<8x16x4xf32>
    %93 = arith.select %91, %89, %92 : vector<8x16x4xi1>, vector<8x16x4xf32>
    %c0_53 = arith.constant 0 : index
    %c5 = arith.constant 5 : index
    %c0_54 = arith.constant 0 : index
    %c0_55 = arith.constant 0 : index
    %c0_56 = arith.constant 0 : index
    %94 = vector.load %arg4[%c0_53, %c5, %c0_54, %c0_55, %c0_56] : memref<1x8x8x16x4xf32, #tpu.memory_space<vmem>>, vector<1x1x8x16x4xf32>
    %95 = vector.shape_cast %94 : vector<1x1x8x16x4xf32> to vector<8x16x4xf32>
    %96 = vector.shape_cast %93 : vector<8x16x4xf32> to vector<1x1x8x16x4xf32>
    tpu.vector_store %arg4[%c0_53, %c5, %c0_54, %c0_55, %c0_56], %96 {strides = array<i32>} : memref<1x8x8x16x4xf32, #tpu.memory_space<vmem>>, vector<1x1x8x16x4xf32>,
    %97 = vector.extract_strided_slice %7 {offsets = [0, 2, 0], sizes = [8, 16, 4], strides = [1, 1, 1]} : vector<8x24x4xf32> to vector<8x16x4xf32>
    %c6_i32 = arith.constant 6 : i32
    %98 = vector.broadcast %c6_i32 : i32 to vector<8x16x4xi32>
    %99 = arith.subi %8, %98 : vector<8x16x4xi32>
    %c8_i32_57 = arith.constant 8 : i32
    %100 = vector.broadcast %c8_i32_57 : i32 to vector<8x16x4xi32>
    %101 = arith.cmpi sge, %99, %100 : vector<8x16x4xi32>
    %102 = arith.mulf %1, %97 : vector<8x16x4xf32>
    %103 = arith.select %101, %12, %102 : vector<8x16x4xi1>, vector<8x16x4xf32>
    %c6_i32_58 = arith.constant 6 : i32
    %104 = vector.broadcast %c6_i32_58 : i32 to vector<8x16x4xi32>
    %105 = arith.cmpi sge, %8, %104 : vector<8x16x4xi32>
    %cst_59 = arith.constant 0.000000e+00 : f32
    %106 = vector.broadcast %cst_59 : f32 to vector<8x16x4xf32>
    %107 = arith.select %105, %103, %106 : vector<8x16x4xi1>, vector<8x16x4xf32>
    %c0_60 = arith.constant 0 : index
    %c6 = arith.constant 6 : index
    %c0_61 = arith.constant 0 : index
    %c0_62 = arith.constant 0 : index
    %c0_63 = arith.constant 0 : index
    %108 = vector.load %arg4[%c0_60, %c6, %c0_61, %c0_62, %c0_63] : memref<1x8x8x16x4xf32, #tpu.memory_space<vmem>>, vector<1x1x8x16x4xf32>
    %109 = vector.shape_cast %108 : vector<1x1x8x16x4xf32> to vector<8x16x4xf32>
    %110 = vector.shape_cast %107 : vector<8x16x4xf32> to vector<1x1x8x16x4xf32>
    tpu.vector_store %arg4[%c0_60, %c6, %c0_61, %c0_62, %c0_63], %110 {strides = array<i32>} : memref<1x8x8x16x4xf32, #tpu.memory_space<vmem>>, vector<1x1x8x16x4xf32>,
    %111 = vector.extract_strided_slice %7 {offsets = [0, 1, 0], sizes = [8, 16, 4], strides = [1, 1, 1]} : vector<8x24x4xf32> to vector<8x16x4xf32>
    %c7_i32 = arith.constant 7 : i32
    %112 = vector.broadcast %c7_i32 : i32 to vector<8x16x4xi32>
    %113 = arith.subi %8, %112 : vector<8x16x4xi32>
    %c8_i32_64 = arith.constant 8 : i32
    %114 = vector.broadcast %c8_i32_64 : i32 to vector<8x16x4xi32>
    %115 = arith.cmpi sge, %113, %114 : vector<8x16x4xi32>
    %116 = arith.mulf %1, %111 : vector<8x16x4xf32>
    %117 = arith.select %115, %12, %116 : vector<8x16x4xi1>, vector<8x16x4xf32>
    %c7_i32_65 = arith.constant 7 : i32
    %118 = vector.broadcast %c7_i32_65 : i32 to vector<8x16x4xi32>
    %119 = arith.cmpi sge, %8, %118 : vector<8x16x4xi32>
    %cst_66 = arith.constant 0.000000e+00 : f32
    %120 = vector.broadcast %cst_66 : f32 to vector<8x16x4xf32>
    %121 = arith.select %119, %117, %120 : vector<8x16x4xi1>, vector<8x16x4xf32>
    %c0_67 = arith.constant 0 : index
    %c7 = arith.constant 7 : index
    %c0_68 = arith.constant 0 : index
    %c0_69 = arith.constant 0 : index
    %c0_70 = arith.constant 0 : index
    %122 = vector.load %arg4[%c0_67, %c7, %c0_68, %c0_69, %c0_70] : memref<1x8x8x16x4xf32, #tpu.memory_space<vmem>>, vector<1x1x8x16x4xf32>
    %123 = vector.shape_cast %122 : vector<1x1x8x16x4xf32> to vector<8x16x4xf32>
    %124 = vector.shape_cast %121 : vector<8x16x4xf32> to vector<1x1x8x16x4xf32>
    tpu.vector_store %arg4[%c0_67, %c7, %c0_68, %c0_69, %c0_70], %124 {strides = array<i32>} : memref<1x8x8x16x4xf32, #tpu.memory_space<vmem>>, vector<1x1x8x16x4xf32>,
    return
  }
  func.func @transform_0(%arg0: i32, %arg1: i32) -> (i32, i32, i32, i32) {
    %c0_i32 = arith.constant 0 : i32
    %c0_i32_0 = arith.constant 0 : i32
    %c0_i32_1 = arith.constant 0 : i32
    return %arg0, %arg1, %c0_i32, %c0_i32_0 : i32, i32, i32, i32
  }
  func.func @transform_1(%arg0: i32, %arg1: i32) -> (i32, i32, i32, i32) {
    %c0_i32 = arith.constant 0 : i32
    %c0_i32_0 = arith.constant 0 : i32
    %c0_i32_1 = arith.constant 0 : i32
    return %arg0, %arg1, %c0_i32, %c0_i32_0 : i32, i32, i32, i32
  }
  func.func @transform_2(%arg0: i32, %arg1: i32) -> (i32, i32, i32, i32, i32) {
    %c0_i32 = arith.constant 0 : i32
    %c0_i32_0 = arith.constant 0 : i32
    %c0_i32_1 = arith.constant 0 : i32
    %c0_i32_2 = arith.constant 0 : i32
    return %arg0, %c0_i32, %arg1, %c0_i32_0, %c0_i32_1 : i32, i32, i32, i32, i32
  }
}

</mosaic_0001>

<llo_original>
// kernel: tpu_custom_call.1
$region0: #{tpu_custom_call.1}
  #allocation0 [shape = 'u32[]', space=smem, size = 0x4, offset = 0x4, fixed_abs, tag = 'smem constant byte address 0x4 - core index']
  #allocation1 [shape = 'u32[72,128]{1,0:T(1,128)}', space=vmem, size = 0x9000, scoped, tag = 'internal scratch']
  #allocation2 [shape = 'f32[8,24,4]{2,1,0:T(8,128)}', space=vmem, size = 0x18000, scoped, tag = 'scratch operand']
  %s0 = inlined_call_operand.vmem [shape: f32[2,16,16,4], index: 0, kind: input, shape index: {}]
  %s1 = inlined_call_operand.vmem [shape: f32[2,16,16,4], index: 1, kind: input, shape index: {}]
  %s2 = inlined_call_operand.vmem [shape: f32[2,8,16,16,4], index: 2, kind: output, shape index: {}]
  %s3 = sld [smem:[#allocation0]]
  $region75: #{tpu_custom_call.1} parent=0
    _
  %s5 = ssub.s32 1, %s3
  %s6 = scalar_select 0, %s5, %s3
  $region1: #{tpu_custom_call.1} parent=0
    #allocation3 [shape = 'u8[1048576]{0}', space=vmem, size = 0x100000, scoped, tag = 'output window, operand 0']
    loop: start=0, step=1, limit=6
    $region2: #{tpu_custom_call.1} parent=1 // loop_pre_header
      _
    $region3: #{tpu_custom_call.1} parent=1 // loop_header
      %s8 = sphi 0, %s12
      %p9 = scmp.ge.s32.totalorder %s8, 6
      %s15 = sphi 0, %s27
      %s16 = sphi 0, %s23
      %s17 = sphi 0, %s15
      %s18 = sphi 0, %s16
      %s19 = sphi 0, %s17
      %s20 = sphi 0, %s18
      %s32 = sphi 0, %s34
      %s35 = sphi 0, %s32
      %s36 = sphi 0, %s35
      %s52 = sphi 0, %s36
      %s60 = sphi 0, %s62
      %s63 = sphi 0, %s60
      %s64 = sphi 0, %s63
      %s80 = sphi 0, %s64
      %s88 = sphi 0, %s90
      %s91 = sphi 0, %s88
      %s92 = sphi 0, %s91
      %s108 = sphi 0, %s92
    $region4: #{tpu_custom_call.1} parent=1 // loop_header_branch
      %11 = sbr.rel (%p9) target = $region8
    $region5: #{tpu_custom_call.1} parent=1 // loop_body
      %s13 = ssub.s32 %s8, 1
      %s14 = ssub.s32 %s8, 2
      %s21 = sadd.s32 1, %s16
      %p22 = scmp.ge.s32.totalorder %s21, 2
      %s23 = scalar_select %p22, 0, %s21
      %s24 = sadd.s32 1, %s15
      %s25 = scalar_select %p22, %s24, %s15
      %p26 = scmp.ge.s32.totalorder %s25, 2
      %s27 = scalar_select %p26, 0, %s25
      %s28 = ssub.s32 %s15, %s27
      %s29 = ssub.s32 %s16, %s23
      %s30 = sor.u32 %s28, %s29
      %p31 = scmp.eq.s32.totalorder %s30, 0
      %s33 = sadd.s32 %s32, 1
      %s34 = scalar_select %p31, %s32, %s33
      %p37 = pneg %p31
      %p38 = scmp.eq.s32.totalorder %s8, 3
      %p39 = por %p37, %p38
      %p40 = scmp.ne.s32.totalorder %s32, %s35
      %p41 = scmp.eq.s32.totalorder %s8, 0
      %p42 = por %p40, %p41
      %p43 = scmp.ne.s32.totalorder %s32, %s35
      %p44 = scmp.eq.s32.totalorder %s13, 3
      %p45 = por %p43, %p44
      %p46 = scmp.ne.s32.totalorder %s35, %s36
      %p47 = scmp.eq.s32.totalorder %s13, 0
      %p48 = por %p46, %p47
      %p49 = scmp.ne.s32.totalorder %s35, %s36
      %p50 = scmp.eq.s32.totalorder %s14, 3
      %p51 = por %p49, %p50
      %p53 = scmp.ne.s32.totalorder %s36, %s52
      %p54 = scmp.eq.s32.totalorder %s14, 0
      %p55 = por %p53, %p54
      %s56 = ssub.s32 %s15, %s27
      %s57 = ssub.s32 %s16, %s23
      %s58 = sor.u32 %s56, %s57
      %p59 = scmp.eq.s32.totalorder %s58, 0
      %s61 = sadd.s32 %s60, 1
      %s62 = scalar_select %p59, %s60, %s61
      %p65 = pneg %p59
      %p66 = scmp.eq.s32.totalorder %s8, 3
      %p67 = por %p65, %p66
      %p68 = scmp.ne.s32.totalorder %s60, %s63
      %p69 = scmp.eq.s32.totalorder %s8, 0
      %p70 = por %p68, %p69
      %p71 = scmp.ne.s32.totalorder %s60, %s63
      %p72 = scmp.eq.s32.totalorder %s13, 3
      %p73 = por %p71, %p72
      %p74 = scmp.ne.s32.totalorder %s63, %s64
      %p75 = scmp.eq.s32.totalorder %s13, 0
      %p76 = por %p74, %p75
      %p77 = scmp.ne.s32.totalorder %s63, %s64
      %p78 = scmp.eq.s32.totalorder %s14, 3
      %p79 = por %p77, %p78
      %p81 = scmp.ne.s32.totalorder %s64, %s80
      %p82 = scmp.eq.s32.totalorder %s14, 0
      %p83 = por %p81, %p82
      %s84 = ssub.s32 %s15, %s27
      %s85 = ssub.s32 %s16, %s23
      %s86 = sor.u32 %s84, %s85
      %p87 = scmp.eq.s32.totalorder %s86, 0
      %s89 = sadd.s32 %s88, 1
      %s90 = scalar_select %p87, %s88, %s89
      %p93 = pneg %p87
      %p94 = scmp.eq.s32.totalorder %s8, 3
      %p95 = por %p93, %p94
      %p96 = scmp.ne.s32.totalorder %s88, %s91
      %p97 = scmp.eq.s32.totalorder %s8, 0
      %p98 = por %p96, %p97
      %p99 = scmp.ne.s32.totalorder %s88, %s91
      %p100 = scmp.eq.s32.totalorder %s13, 3
      %p101 = por %p99, %p100
      %p102 = scmp.ne.s32.totalorder %s91, %s92
      %p103 = scmp.eq.s32.totalorder %s13, 0
      %p104 = por %p102, %p103
      %p105 = scmp.ne.s32.totalorder %s91, %s92
      %p106 = scmp.eq.s32.totalorder %s14, 3
      %p107 = por %p105, %p106
      %p109 = scmp.ne.s32.totalorder %s92, %s108
      %p110 = scmp.eq.s32.totalorder %s14, 0
      %p111 = por %p109, %p110
      %p112 = scmp.le.s32.totalorder 1, %s8
      %p113 = scmp.lt.s32.totalorder %s8, 5
      %p114 = pnand %p112, %p113
      %p115 = pneg %p114
      // Predicated region
      $region9: #{tpu_custom_call.1} parent=5 // pred_check
        _
      $region10: #{tpu_custom_call.1} parent=5 // pred_check_branch
        %117 = sbr.rel (%p114) target = $region12
      $region11: #{tpu_custom_call.1} parent=5 // pred_region
        %s118 = ssub.s32 %s8, 1
      $region12: #{tpu_custom_call.1} parent=5 // pred_fallthru
        _
      %p119 = scmp.lt.s32.totalorder %s8, 4
      // Predicated region
      $region13: #{tpu_custom_call.1} parent=5 // pred_check
        %p120 = pneg %p119
      $region14: #{tpu_custom_call.1} parent=5 // pred_check_branch
        %122 = sbr.rel (%p120) target = $region16
      $region15: #{tpu_custom_call.1} parent=5 // pred_region
        // Predicated region
        $region17: #{tpu_custom_call.1} parent=15 // pred_check
          %p123 = pneg %p42
        $region18: #{tpu_custom_call.1} parent=15 // pred_check_branch
          %125 = sbr.rel (%p123) target = $region20
        $region19: #{tpu_custom_call.1} parent=15 // pred_region
          %s126 = smul.u32 8, %s16
          %p127 = scmp.lt.s32.totalorder %s15, 1
          %s128 = scalar_select %p127, %s15, 1
          %p129 = scmp.lt.s32.totalorder %s126, 15
          %s130 = scalar_select %p129, %s126, 15
          %s131 = smul.addr %s130, 2
          %s132 = smul.addr %s128, 32
          %s133 = sadd.s32 %s131, %s132
          %s134 = smul.addr %s133, 8
          %s135 = scalar_lea.vmem %s0, %s134
          %s136 = smul.u32 8, %s16
        $region20: #{tpu_custom_call.1} parent=15 // pred_fallthru
          _
        // Predicated region
        $region21: #{tpu_custom_call.1} parent=15 // pred_check
          %p137 = pneg %p70
        $region22: #{tpu_custom_call.1} parent=15 // pred_check_branch
          %139 = sbr.rel (%p137) target = $region24
        $region23: #{tpu_custom_call.1} parent=15 // pred_region
          %s140 = smul.u32 8, %s16
          %p141 = scmp.lt.s32.totalorder %s15, 1
          %s142 = scalar_select %p141, %s15, 1
          %p143 = scmp.lt.s32.totalorder %s140, 15
          %s144 = scalar_select %p143, %s140, 15
          %s145 = smul.addr %s144, 2
          %s146 = smul.addr %s142, 32
          %s147 = sadd.s32 %s145, %s146
          %s148 = smul.addr %s147, 8
          %s149 = scalar_lea.vmem %s1, %s148
          %s150 = smul.u32 8, %s16
        $region24: #{tpu_custom_call.1} parent=15 // pred_fallthru
          _
      $region16: #{tpu_custom_call.1} parent=5 // pred_fallthru
        _
      %p151 = scmp.le.s32.totalorder 1, %s8
      %p152 = scmp.lt.s32.totalorder %s8, 5
      %p153 = pnand %p151, %p152
      %p154 = pneg %p153
      // Predicated region
      $region25: #{tpu_custom_call.1} parent=5 // pred_check
        _
      $region26: #{tpu_custom_call.1} parent=5 // pred_check_branch
        %156 = sbr.rel (%p153) target = $region28
      $region27: #{tpu_custom_call.1} parent=5 // pred_region
        %s157 = ssub.s32 %s8, 1
        %s158 = smul.u32 8, %s18
        %p159 = scmp.lt.s32.totalorder %s17, 1
        %s160 = scalar_select %p159, %s17, 1
        %p161 = scmp.lt.s32.totalorder %s158, 15
        %s162 = scalar_select %p161, %s158, 15
        %s163 = smul.addr %s162, 2
        %s164 = smul.addr %s160, 32
        %s165 = sadd.s32 %s163, %s164
        %s166 = smul.addr %s165, 8
        %s167 = scalar_lea.vmem %s0, %s166
        %p168 = pneg %p48
        %p169 = pneg %p45
        %s170 = smul.u32 8, %s18
        %p171 = scmp.lt.s32.totalorder %s17, 1
        %s172 = scalar_select %p171, %s17, 1
        %p173 = scmp.lt.s32.totalorder %s170, 15
        %s174 = scalar_select %p173, %s170, 15
        %s175 = smul.addr %s174, 2
        %s176 = smul.addr %s172, 32
        %s177 = sadd.s32 %s175, %s176
        %s178 = smul.addr %s177, 8
        %s179 = scalar_lea.vmem %s1, %s178
        %p180 = pneg %p76
        %p181 = pneg %p73
        %p182 = pneg %p104
        %p183 = pneg %p101
        %s184 = sand.u32 %s91, 1
        %s185 = sand.u32 %s91, 1
        %s186 = smul.addr %s185, 1024
        %s187 = scalar_lea.vmem [#allocation3], %s186
        %s188 = smul.u32 8, %s18
        %p189 = scmp.lt.s32.totalorder %s17, 1
        %s190 = scalar_select %p189, %s17, 1
        %p191 = scmp.lt.s32.totalorder %s188, 15
        %s192 = scalar_select %p191, %s188, 15
        %s193 = smul.addr %s192, 2
        %s194 = smul.addr %s190, 32
        %s195 = sadd.s32 %s193, %s194
        %s196 = smul.addr %s195, 8
        %s197 = scalar_lea.vmem %s0, %s196
        %s198 = smul.u32 8, %s18
        %s199 = smul.u32 8, %s18
        %p200 = scmp.lt.s32.totalorder %s17, 1
        %s201 = scalar_select %p200, %s17, 1
        %p202 = scmp.lt.s32.totalorder %s199, 15
        %s203 = scalar_select %p202, %s199, 15
        %s204 = smul.addr %s203, 2
        %s205 = smul.addr %s201, 32
        %s206 = sadd.s32 %s204, %s205
        %s207 = smul.addr %s206, 8
        %s208 = scalar_lea.vmem %s1, %s207
        %s209 = smul.u32 8, %s18
        %s210 = smul.u32 8, %s18
        %v211 = vld [vmem:[%s197] sm:$0xff]
        %v212 = vld [vmem:[%s197 + $0x8] sm:$0xff]
        %v213 = vld [vmem:[%s197 + $0x10] sm:$0xff]
        %v214 = vld [vmem:[%s197 + $0x18] sm:$0xff]
        %v215 = vld [vmem:[%s197 + $0x20] sm:$0xff]
        %v216 = vld [vmem:[%s197 + $0x28] sm:$0xff]
        %v217 = vld [vmem:[%s197 + $0x30] sm:$0xff]
        %v218 = vld [vmem:[%s197 + $0x38] sm:$0xff]
        %v219 = vld [vmem:[%s197 + $0x40] sm:$0xff]
        %v220 = vld [vmem:[%s197 + $0x48] sm:$0xff]
        %v221 = vld [vmem:[%s197 + $0x50] sm:$0xff]
        %v222 = vld [vmem:[%s197 + $0x58] sm:$0xff]
        %v223 = vld [vmem:[%s197 + $0x60] sm:$0xff]
        %v224 = vld [vmem:[%s197 + $0x68] sm:$0xff]
        %v225 = vld [vmem:[%s197 + $0x70] sm:$0xff]
        %v226 = vld [vmem:[%s197 + $0x78] sm:$0xff]
        %v227 = vld [vmem:[%s208] sm:$0xff]
        %v228 = vld [vmem:[%s208 + $0x8] sm:$0xff]
        %v229 = vld [vmem:[%s208 + $0x10] sm:$0xff]
        %v230 = vld [vmem:[%s208 + $0x18] sm:$0xff]
        %v231 = vld [vmem:[%s208 + $0x20] sm:$0xff]
        %v232 = vld [vmem:[%s208 + $0x28] sm:$0xff]
        %v233 = vld [vmem:[%s208 + $0x30] sm:$0xff]
        %v234 = vld [vmem:[%s208 + $0x38] sm:$0xff]
        %v235 = vld [vmem:[%s208 + $0x40] sm:$0xff]
        %v236 = vld [vmem:[%s208 + $0x48] sm:$0xff]
        %v237 = vld [vmem:[%s208 + $0x50] sm:$0xff]
        %v238 = vld [vmem:[%s208 + $0x58] sm:$0xff]
        %v239 = vld [vmem:[%s208 + $0x60] sm:$0xff]
        %v240 = vld [vmem:[%s208 + $0x68] sm:$0xff]
        %v241 = vld [vmem:[%s208 + $0x70] sm:$0xff]
        %v242 = vld [vmem:[%s208 + $0x78] sm:$0xff]
        %vm243 = vcmask 31744
        %244 = vst.msk [vmem:[#allocation2] sm:$0xff] %vm243, 0.0
        %245 = vst.msk [vmem:[#allocation2 + $0x8] sm:$0xff] %vm243, 0.0
        %246 = vst.msk [vmem:[#allocation2 + $0x10] sm:$0xff] %vm243, 0.0
        %247 = vst.msk [vmem:[#allocation2 + $0x18] sm:$0xff] %vm243, 0.0
        %248 = vst.msk [vmem:[#allocation2 + $0x20] sm:$0xff] %vm243, 0.0
        %249 = vst.msk [vmem:[#allocation2 + $0x28] sm:$0xff] %vm243, 0.0
        %250 = vst.msk [vmem:[#allocation2 + $0x30] sm:$0xff] %vm243, 0.0
        %251 = vst.msk [vmem:[#allocation2 + $0x38] sm:$0xff] %vm243, 0.0
        %252 = vst.msk [vmem:[#allocation2 + $0x40] sm:$0xff] %vm243, 0.0
        %253 = vst.msk [vmem:[#allocation2 + $0x48] sm:$0xff] %vm243, 0.0
        %254 = vst.msk [vmem:[#allocation2 + $0x50] sm:$0xff] %vm243, 0.0
        %255 = vst.msk [vmem:[#allocation2 + $0x58] sm:$0xff] %vm243, 0.0
        %256 = vst.msk [vmem:[#allocation2 + $0x60] sm:$0xff] %vm243, 0.0
        %257 = vst.msk [vmem:[#allocation2 + $0x68] sm:$0xff] %vm243, 0.0
        %258 = vst.msk [vmem:[#allocation2 + $0x70] sm:$0xff] %vm243, 0.0
        %259 = vst.msk [vmem:[#allocation2 + $0x78] sm:$0xff] %vm243, 0.0
        %260 = vst.msk [vmem:[#allocation2 + $0x80] sm:$0xff] %vm243, 0.0
        %261 = vst.msk [vmem:[#allocation2 + $0x88] sm:$0xff] %vm243, 0.0
        %262 = vst.msk [vmem:[#allocation2 + $0x90] sm:$0xff] %vm243, 0.0
        %263 = vst.msk [vmem:[#allocation2 + $0x98] sm:$0xff] %vm243, 0.0
        %264 = vst.msk [vmem:[#allocation2 + $0xa0] sm:$0xff] %vm243, 0.0
        %265 = vst.msk [vmem:[#allocation2 + $0xa8] sm:$0xff] %vm243, 0.0
        %266 = vst.msk [vmem:[#allocation2 + $0xb0] sm:$0xff] %vm243, 0.0
        %267 = vst.msk [vmem:[#allocation2 + $0xb8] sm:$0xff] %vm243, 0.0
        %268 = vst.msk [vmem:[#allocation2 + $0x8] sm:$0xff] %vm243, %v227
        %269 = vst.msk [vmem:[#allocation2 + $0x10] sm:$0xff] %vm243, %v228
        %270 = vst.msk [vmem:[#allocation2 + $0x20] sm:$0xff] %vm243, %v229
        %271 = vst.msk [vmem:[#allocation2 + $0x28] sm:$0xff] %vm243, %v230
        %272 = vst.msk [vmem:[#allocation2 + $0x38] sm:$0xff] %vm243, %v231
        %273 = vst.msk [vmem:[#allocation2 + $0x40] sm:$0xff] %vm243, %v232
        %274 = vst.msk [vmem:[#allocation2 + $0x50] sm:$0xff] %vm243, %v233
        %275 = vst.msk [vmem:[#allocation2 + $0x58] sm:$0xff] %vm243, %v234
        %276 = vst.msk [vmem:[#allocation2 + $0x68] sm:$0xff] %vm243, %v235
        %277 = vst.msk [vmem:[#allocation2 + $0x70] sm:$0xff] %vm243, %v236
        %278 = vst.msk [vmem:[#allocation2 + $0x80] sm:$0xff] %vm243, %v237
        %279 = vst.msk [vmem:[#allocation2 + $0x88] sm:$0xff] %vm243, %v238
        %280 = vst.msk [vmem:[#allocation2 + $0x98] sm:$0xff] %vm243, %v239
        %281 = vst.msk [vmem:[#allocation2 + $0xa0] sm:$0xff] %vm243, %v240
        %282 = vst.msk [vmem:[#allocation2 + $0xb0] sm:$0xff] %vm243, %v241
        %283 = vst.msk [vmem:[#allocation2 + $0xb8] sm:$0xff] %vm243, %v242
        %v284 = vld [vmem:[#allocation2] sm:$0xff]
        %v285 = vld [vmem:[#allocation2 + $0x8] sm:$0xff]
        %v286 = vld [vmem:[#allocation2 + $0x10] sm:$0xff]
        %v287 = vld [vmem:[#allocation2 + $0x18] sm:$0xff]
        %v288 = vld [vmem:[#allocation2 + $0x20] sm:$0xff]
        %v289 = vld [vmem:[#allocation2 + $0x28] sm:$0xff]
        %v290 = vld [vmem:[#allocation2 + $0x30] sm:$0xff]
        %v291 = vld [vmem:[#allocation2 + $0x38] sm:$0xff]
        %v292 = vld [vmem:[#allocation2 + $0x40] sm:$0xff]
        %v293 = vld [vmem:[#allocation2 + $0x48] sm:$0xff]
        %v294 = vld [vmem:[#allocation2 + $0x50] sm:$0xff]
        %v295 = vld [vmem:[#allocation2 + $0x58] sm:$0xff]
        %v296 = vld [vmem:[#allocation2 + $0x60] sm:$0xff]
        %v297 = vld [vmem:[#allocation2 + $0x68] sm:$0xff]
        %v298 = vld [vmem:[#allocation2 + $0x70] sm:$0xff]
        %v299 = vld [vmem:[#allocation2 + $0x78] sm:$0xff]
        %v300 = vld [vmem:[#allocation2 + $0x80] sm:$0xff]
        %v301 = vld [vmem:[#allocation2 + $0x88] sm:$0xff]
        %v302 = vld [vmem:[#allocation2 + $0x90] sm:$0xff]
        %v303 = vld [vmem:[#allocation2 + $0x98] sm:$0xff]
        %v304 = vld [vmem:[#allocation2 + $0xa0] sm:$0xff]
        %v305 = vld [vmem:[#allocation2 + $0xa8] sm:$0xff]
        %v306 = vld [vmem:[#allocation2 + $0xb0] sm:$0xff]
        %v307 = vld [vmem:[#allocation2 + $0xb8] sm:$0xff]
        %v308 = vlaneseq
        %v309 = vshrl.u32 %v308, 7
        %v310 = vadd.s32 %v309, 8
        %v311 = vperm.slane %v227, 7
        %v312 = vperm.slane %v229, 7
        %v313 = vperm.slane %v231, 7
        %v314 = vperm.slane %v233, 7
        %v315 = vperm.slane %v235, 7
        %v316 = vperm.slane %v237, 7
        %v317 = vperm.slane %v239, 7
        %v318 = vperm.slane %v241, 7
        %v319 = vmul.f32 %v211, %v311
        %v320 = vmul.f32 %v212, %v311
        %v321 = vmul.f32 %v213, %v312
        %v322 = vmul.f32 %v214, %v312
        %v323 = vmul.f32 %v215, %v313
        %v324 = vmul.f32 %v216, %v313
        %v325 = vmul.f32 %v217, %v314
        %v326 = vmul.f32 %v218, %v314
        %v327 = vmul.f32 %v219, %v315
        %v328 = vmul.f32 %v220, %v315
        %v329 = vmul.f32 %v221, %v316
        %v330 = vmul.f32 %v222, %v316
        %v331 = vmul.f32 %v223, %v317
        %v332 = vmul.f32 %v224, %v317
        %v333 = vmul.f32 %v225, %v318
        %v334 = vmul.f32 %v226, %v318
        %vm335 = vcmp.ge.s32.totalorder %v309, 8
        %vm336 = vcmp.ge.s32.totalorder %v310, 8
        %v337 = vmul.f32 %v211, %v285
        %v338 = vmul.f32 %v212, %v286
        %v339 = vmul.f32 %v213, %v288
        %v340 = vmul.f32 %v214, %v289
        %v341 = vmul.f32 %v215, %v291
        %v342 = vmul.f32 %v216, %v292
        %v343 = vmul.f32 %v217, %v294
        %v344 = vmul.f32 %v218, %v295
        %v345 = vmul.f32 %v219, %v297
        %v346 = vmul.f32 %v220, %v298
        %v347 = vmul.f32 %v221, %v300
        %v348 = vmul.f32 %v222, %v301
        %v349 = vmul.f32 %v223, %v303
        %v350 = vmul.f32 %v224, %v304
        %v351 = vmul.f32 %v225, %v306
        %v352 = vmul.f32 %v226, %v307
        %v353 = vsel %vm335, %v319, %v337
        %v354 = vsel %vm336, %v320, %v338
        %v355 = vsel %vm335, %v321, %v339
        %v356 = vsel %vm336, %v322, %v340
        %v357 = vsel %vm335, %v323, %v341
        %v358 = vsel %vm336, %v324, %v342
        %v359 = vsel %vm335, %v325, %v343
        %v360 = vsel %vm336, %v326, %v344
        %v361 = vsel %vm335, %v327, %v345
        %v362 = vsel %vm336, %v328, %v346
        %v363 = vsel %vm335, %v329, %v347
        %v364 = vsel %vm336, %v330, %v348
        %v365 = vsel %vm335, %v331, %v349
        %v366 = vsel %vm336, %v332, %v350
        %v367 = vsel %vm335, %v333, %v351
        %v368 = vsel %vm336, %v334, %v352
        %vm369 = vcmp.ge.s32.totalorder %v309, 0
        %vm370 = vcmp.ge.s32.totalorder %v310, 0
        %v371 = vsel %vm369, %v353, 0.0
        %v372 = vsel %vm370, %v354, 0.0
        %v373 = vsel %vm369, %v355, 0.0
        %v374 = vsel %vm370, %v356, 0.0
        %v375 = vsel %vm369, %v357, 0.0
        %v376 = vsel %vm370, %v358, 0.0
        %v377 = vsel %vm369, %v359, 0.0
        %v378 = vsel %vm370, %v360, 0.0
        %v379 = vsel %vm369, %v361, 0.0
        %v380 = vsel %vm370, %v362, 0.0
        %v381 = vsel %vm369, %v363, 0.0
        %v382 = vsel %vm370, %v364, 0.0
        %v383 = vsel %vm369, %v365, 0.0
        %v384 = vsel %vm370, %v366, 0.0
        %v385 = vsel %vm369, %v367, 0.0
        %v386 = vsel %vm370, %v368, 0.0
        %387 = vst.msk [vmem:[%s187] sm:$0xff] %vm243, %v371
        %388 = vst.msk [vmem:[%s187 + $0x8] sm:$0xff] %vm243, %v372
        %389 = vst.msk [vmem:[%s187 + $0x10] sm:$0xff] %vm243, %v373
        %390 = vst.msk [vmem:[%s187 + $0x18] sm:$0xff] %vm243, %v374
        %391 = vst.msk [vmem:[%s187 + $0x20] sm:$0xff] %vm243, %v375
        %392 = vst.msk [vmem:[%s187 + $0x28] sm:$0xff] %vm243, %v376
        %393 = vst.msk [vmem:[%s187 + $0x30] sm:$0xff] %vm243, %v377
        %394 = vst.msk [vmem:[%s187 + $0x38] sm:$0xff] %vm243, %v378
        %395 = vst.msk [vmem:[%s187 + $0x40] sm:$0xff] %vm243, %v379
        %396 = vst.msk [vmem:[%s187 + $0x48] sm:$0xff] %vm243, %v380
        %397 = vst.msk [vmem:[%s187 + $0x50] sm:$0xff] %vm243, %v381
        %398 = vst.msk [vmem:[%s187 + $0x58] sm:$0xff] %vm243, %v382
        %399 = vst.msk [vmem:[%s187 + $0x60] sm:$0xff] %vm243, %v383
        %400 = vst.msk [vmem:[%s187 + $0x68] sm:$0xff] %vm243, %v384
        %401 = vst.msk [vmem:[%s187 + $0x70] sm:$0xff] %vm243, %v385
        %402 = vst.msk [vmem:[%s187 + $0x78] sm:$0xff] %vm243, %v386
        %v403 = vsub.s32 %v309, 1
        %v404 = vsub.s32 %v310, 1
        %vm405 = vcmp.ge.s32.totalorder %v403, 8
        %vm406 = vcmp.ge.s32.totalorder %v404, 8
        %vm431 = vcmask 1040384
        %v432 = vrot.slane %v284, 7
        %v433 = vrot.slane %v285, 7
        %v434 = vsel %vm431, %v432, %v433
        %v435 = vrot.slane %v286, 7
        %v436 = vsel %vm431, %v433, %v435
        %v437 = vrot.slane %v287, 7
        %v438 = vrot.slane %v288, 7
        %v439 = vsel %vm431, %v437, %v438
        %v440 = vrot.slane %v289, 7
        %v441 = vsel %vm431, %v438, %v440
        %v442 = vrot.slane %v290, 7
        %v443 = vrot.slane %v291, 7
        %v444 = vsel %vm431, %v442, %v443
        %v445 = vrot.slane %v292, 7
        %v446 = vsel %vm431, %v443, %v445
        %v447 = vrot.slane %v293, 7
        %v448 = vrot.slane %v294, 7
        %v449 = vsel %vm431, %v447, %v448
        %v450 = vrot.slane %v295, 7
        %v451 = vsel %vm431, %v448, %v450
        %v452 = vrot.slane %v296, 7
        %v453 = vrot.slane %v297, 7
        %v454 = vsel %vm431, %v452, %v453
        %v455 = vrot.slane %v298, 7
        %v456 = vsel %vm431, %v453, %v455
        %v457 = vrot.slane %v299, 7
        %v458 = vrot.slane %v300, 7
        %v459 = vsel %vm431, %v457, %v458
        %v460 = vrot.slane %v301, 7
        %v461 = vsel %vm431, %v458, %v460
        %v462 = vrot.slane %v302, 7
        %v463 = vrot.slane %v303, 7
        %v464 = vsel %vm431, %v462, %v463
        %v465 = vrot.slane %v304, 7
        %v466 = vsel %vm431, %v463, %v465
        %v467 = vrot.slane %v305, 7
        %v468 = vrot.slane %v306, 7
        %v469 = vsel %vm431, %v467, %v468
        %v470 = vrot.slane %v307, 7
        %v471 = vsel %vm431, %v468, %v470
        %v488 = vmul.f32 %v211, %v434
        %v489 = vmul.f32 %v212, %v436
        %v490 = vmul.f32 %v213, %v439
        %v491 = vmul.f32 %v214, %v441
        %v492 = vmul.f32 %v215, %v444
        %v493 = vmul.f32 %v216, %v446
        %v494 = vmul.f32 %v217, %v449
        %v495 = vmul.f32 %v218, %v451
        %v496 = vmul.f32 %v219, %v454
        %v497 = vmul.f32 %v220, %v456
        %v498 = vmul.f32 %v221, %v459
        %v499 = vmul.f32 %v222, %v461
        %v500 = vmul.f32 %v223, %v464
        %v501 = vmul.f32 %v224, %v466
        %v502 = vmul.f32 %v225, %v469
        %v503 = vmul.f32 %v226, %v471
        %v504 = vsel %vm405, %v319, %v488
        %v505 = vsel %vm406, %v320, %v489
        %v506 = vsel %vm405, %v321, %v490
        %v507 = vsel %vm406, %v322, %v491
        %v508 = vsel %vm405, %v323, %v492
        %v509 = vsel %vm406, %v324, %v493
        %v510 = vsel %vm405, %v325, %v494
        %v511 = vsel %vm406, %v326, %v495
        %v512 = vsel %vm405, %v327, %v496
        %v513 = vsel %vm406, %v328, %v497
        %v514 = vsel %vm405, %v329, %v498
        %v515 = vsel %vm406, %v330, %v499
        %v516 = vsel %vm405, %v331, %v500
        %v517 = vsel %vm406, %v332, %v501
        %v518 = vsel %vm405, %v333, %v502
        %v519 = vsel %vm406, %v334, %v503
        %vm520 = vcmp.ge.s32.totalorder %v309, 1
        %vm521 = vcmp.ge.s32.totalorder %v310, 1
        %v522 = vsel %vm520, %v504, 0.0
        %v523 = vsel %vm521, %v505, 0.0
        %v524 = vsel %vm520, %v506, 0.0
        %v525 = vsel %vm521, %v507, 0.0
        %v526 = vsel %vm520, %v508, 0.0
        %v527 = vsel %vm521, %v509, 0.0
        %v528 = vsel %vm520, %v510, 0.0
        %v529 = vsel %vm521, %v511, 0.0
        %v530 = vsel %vm520, %v512, 0.0
        %v531 = vsel %vm521, %v513, 0.0
        %v532 = vsel %vm520, %v514, 0.0
        %v533 = vsel %vm521, %v515, 0.0
        %v534 = vsel %vm520, %v516, 0.0
        %v535 = vsel %vm521, %v517, 0.0
        %v536 = vsel %vm520, %v518, 0.0
        %v537 = vsel %vm521, %v519, 0.0
        %s538 = scalar_lea.vmem %s187, 128 [#allocation3]
        %539 = vst.msk [vmem:[%s538] sm:$0xff] %vm243, %v522
        %540 = vst.msk [vmem:[%s538 + $0x8] sm:$0xff] %vm243, %v523
        %541 = vst.msk [vmem:[%s538 + $0x10] sm:$0xff] %vm243, %v524
        %542 = vst.msk [vmem:[%s538 + $0x18] sm:$0xff] %vm243, %v525
        %543 = vst.msk [vmem:[%s538 + $0x20] sm:$0xff] %vm243, %v526
        %544 = vst.msk [vmem:[%s538 + $0x28] sm:$0xff] %vm243, %v527
        %545 = vst.msk [vmem:[%s538 + $0x30] sm:$0xff] %vm243, %v528
        %546 = vst.msk [vmem:[%s538 + $0x38] sm:$0xff] %vm243, %v529
        %547 = vst.msk [vmem:[%s538 + $0x40] sm:$0xff] %vm243, %v530
        %548 = vst.msk [vmem:[%s538 + $0x48] sm:$0xff] %vm243, %v531
        %549 = vst.msk [vmem:[%s538 + $0x50] sm:$0xff] %vm243, %v532
        %550 = vst.msk [vmem:[%s538 + $0x58] sm:$0xff] %vm243, %v533
        %551 = vst.msk [vmem:[%s538 + $0x60] sm:$0xff] %vm243, %v534
        %552 = vst.msk [vmem:[%s538 + $0x68] sm:$0xff] %vm243, %v535
        %553 = vst.msk [vmem:[%s538 + $0x70] sm:$0xff] %vm243, %v536
        %554 = vst.msk [vmem:[%s538 + $0x78] sm:$0xff] %vm243, %v537
        %v555 = vsub.s32 %v309, 2
        %v556 = vsub.s32 %v310, 2
        %vm557 = vcmp.ge.s32.totalorder %v555, 8
        %vm558 = vcmp.ge.s32.totalorder %v556, 8
        %vm559 = vcmask 1041408
        %v560 = vrot.slane %v284, 6
        %v561 = vrot.slane %v285, 6
        %v562 = vsel %vm559, %v560, %v561
        %v563 = vrot.slane %v286, 6
        %v564 = vsel %vm559, %v561, %v563
        %v565 = vrot.slane %v287, 6
        %v566 = vrot.slane %v288, 6
        %v567 = vsel %vm559, %v565, %v566
        %v568 = vrot.slane %v289, 6
        %v569 = vsel %vm559, %v566, %v568
        %v570 = vrot.slane %v290, 6
        %v571 = vrot.slane %v291, 6
        %v572 = vsel %vm559, %v570, %v571
        %v573 = vrot.slane %v292, 6
        %v574 = vsel %vm559, %v571, %v573
        %v575 = vrot.slane %v293, 6
        %v576 = vrot.slane %v294, 6
        %v577 = vsel %vm559, %v575, %v576
        %v578 = vrot.slane %v295, 6
        %v579 = vsel %vm559, %v576, %v578
        %v580 = vrot.slane %v296, 6
        %v581 = vrot.slane %v297, 6
        %v582 = vsel %vm559, %v580, %v581
        %v583 = vrot.slane %v298, 6
        %v584 = vsel %vm559, %v581, %v583
        %v585 = vrot.slane %v299, 6
        %v586 = vrot.slane %v300, 6
        %v587 = vsel %vm559, %v585, %v586
        %v588 = vrot.slane %v301, 6
        %v589 = vsel %vm559, %v586, %v588
        %v590 = vrot.slane %v302, 6
        %v591 = vrot.slane %v303, 6
        %v592 = vsel %vm559, %v590, %v591
        %v593 = vrot.slane %v304, 6
        %v594 = vsel %vm559, %v591, %v593
        %v595 = vrot.slane %v305, 6
        %v596 = vrot.slane %v306, 6
        %v597 = vsel %vm559, %v595, %v596
        %v598 = vrot.slane %v307, 6
        %v599 = vsel %vm559, %v596, %v598
        %v616 = vmul.f32 %v211, %v562
        %v617 = vmul.f32 %v212, %v564
        %v618 = vmul.f32 %v213, %v567
        %v619 = vmul.f32 %v214, %v569
        %v620 = vmul.f32 %v215, %v572
        %v621 = vmul.f32 %v216, %v574
        %v622 = vmul.f32 %v217, %v577
        %v623 = vmul.f32 %v218, %v579
        %v624 = vmul.f32 %v219, %v582
        %v625 = vmul.f32 %v220, %v584
        %v626 = vmul.f32 %v221, %v587
        %v627 = vmul.f32 %v222, %v589
        %v628 = vmul.f32 %v223, %v592
        %v629 = vmul.f32 %v224, %v594
        %v630 = vmul.f32 %v225, %v597
        %v631 = vmul.f32 %v226, %v599
        %v632 = vsel %vm557, %v319, %v616
        %v633 = vsel %vm558, %v320, %v617
        %v634 = vsel %vm557, %v321, %v618
        %v635 = vsel %vm558, %v322, %v619
        %v636 = vsel %vm557, %v323, %v620
        %v637 = vsel %vm558, %v324, %v621
        %v638 = vsel %vm557, %v325, %v622
        %v639 = vsel %vm558, %v326, %v623
        %v640 = vsel %vm557, %v327, %v624
        %v641 = vsel %vm558, %v328, %v625
        %v642 = vsel %vm557, %v329, %v626
        %v643 = vsel %vm558, %v330, %v627
        %v644 = vsel %vm557, %v331, %v628
        %v645 = vsel %vm558, %v332, %v629
        %v646 = vsel %vm557, %v333, %v630
        %v647 = vsel %vm558, %v334, %v631
        %vm648 = vcmp.ge.s32.totalorder %v309, 2
        %vm649 = vcmp.ge.s32.totalorder %v310, 2
        %v650 = vsel %vm648, %v632, 0.0
        %v651 = vsel %vm649, %v633, 0.0
        %v652 = vsel %vm648, %v634, 0.0
        %v653 = vsel %vm649, %v635, 0.0
        %v654 = vsel %vm648, %v636, 0.0
        %v655 = vsel %vm649, %v637, 0.0
        %v656 = vsel %vm648, %v638, 0.0
        %v657 = vsel %vm649, %v639, 0.0
        %v658 = vsel %vm648, %v640, 0.0
        %v659 = vsel %vm649, %v641, 0.0
        %v660 = vsel %vm648, %v642, 0.0
        %v661 = vsel %vm649, %v643, 0.0
        %v662 = vsel %vm648, %v644, 0.0
        %v663 = vsel %vm649, %v645, 0.0
        %v664 = vsel %vm648, %v646, 0.0
        %v665 = vsel %vm649, %v647, 0.0
        %s666 = scalar_lea.vmem %s187, 256 [#allocation3]
        %667 = vst.msk [vmem:[%s666] sm:$0xff] %vm243, %v650
        %668 = vst.msk [vmem:[%s666 + $0x8] sm:$0xff] %vm243, %v651
        %669 = vst.msk [vmem:[%s666 + $0x10] sm:$0xff] %vm243, %v652
        %670 = vst.msk [vmem:[%s666 + $0x18] sm:$0xff] %vm243, %v653
        %671 = vst.msk [vmem:[%s666 + $0x20] sm:$0xff] %vm243, %v654
        %672 = vst.msk [vmem:[%s666 + $0x28] sm:$0xff] %vm243, %v655
        %673 = vst.msk [vmem:[%s666 + $0x30] sm:$0xff] %vm243, %v656
        %674 = vst.msk [vmem:[%s666 + $0x38] sm:$0xff] %vm243, %v657
        %675 = vst.msk [vmem:[%s666 + $0x40] sm:$0xff] %vm243, %v658
        %676 = vst.msk [vmem:[%s666 + $0x48] sm:$0xff] %vm243, %v659
        %677 = vst.msk [vmem:[%s666 + $0x50] sm:$0xff] %vm243, %v660
        %678 = vst.msk [vmem:[%s666 + $0x58] sm:$0xff] %vm243, %v661
        %679 = vst.msk [vmem:[%s666 + $0x60] sm:$0xff] %vm243, %v662
        %680 = vst.msk [vmem:[%s666 + $0x68] sm:$0xff] %vm243, %v663
        %681 = vst.msk [vmem:[%s666 + $0x70] sm:$0xff] %vm243, %v664
        %682 = vst.msk [vmem:[%s666 + $0x78] sm:$0xff] %vm243, %v665
        %v683 = vsub.s32 %v309, 3
        %v684 = vsub.s32 %v310, 3
        %vm685 = vcmp.ge.s32.totalorder %v683, 8
        %vm686 = vcmp.ge.s32.totalorder %v684, 8
        %vm687 = vcmask 1042432
        %v688 = vrot.slane %v284, 5
        %v689 = vrot.slane %v285, 5
        %v690 = vsel %vm687, %v688, %v689
        %v691 = vrot.slane %v286, 5
        %v692 = vsel %vm687, %v689, %v691
        %v693 = vrot.slane %v287, 5
        %v694 = vrot.slane %v288, 5
        %v695 = vsel %vm687, %v693, %v694
        %v696 = vrot.slane %v289, 5
        %v697 = vsel %vm687, %v694, %v696
        %v698 = vrot.slane %v290, 5
        %v699 = vrot.slane %v291, 5
        %v700 = vsel %vm687, %v698, %v699
        %v701 = vrot.slane %v292, 5
        %v702 = vsel %vm687, %v699, %v701
        %v703 = vrot.slane %v293, 5
        %v704 = vrot.slane %v294, 5
        %v705 = vsel %vm687, %v703, %v704
        %v706 = vrot.slane %v295, 5
        %v707 = vsel %vm687, %v704, %v706
        %v708 = vrot.slane %v296, 5
        %v709 = vrot.slane %v297, 5
        %v710 = vsel %vm687, %v708, %v709
        %v711 = vrot.slane %v298, 5
        %v712 = vsel %vm687, %v709, %v711
        %v713 = vrot.slane %v299, 5
        %v714 = vrot.slane %v300, 5
        %v715 = vsel %vm687, %v713, %v714
        %v716 = vrot.slane %v301, 5
        %v717 = vsel %vm687, %v714, %v716
        %v718 = vrot.slane %v302, 5
        %v719 = vrot.slane %v303, 5
        %v720 = vsel %vm687, %v718, %v719
        %v721 = vrot.slane %v304, 5
        %v722 = vsel %vm687, %v719, %v721
        %v723 = vrot.slane %v305, 5
        %v724 = vrot.slane %v306, 5
        %v725 = vsel %vm687, %v723, %v724
        %v726 = vrot.slane %v307, 5
        %v727 = vsel %vm687, %v724, %v726
        %v744 = vmul.f32 %v211, %v690
        %v745 = vmul.f32 %v212, %v692
        %v746 = vmul.f32 %v213, %v695
        %v747 = vmul.f32 %v214, %v697
        %v748 = vmul.f32 %v215, %v700
        %v749 = vmul.f32 %v216, %v702
        %v750 = vmul.f32 %v217, %v705
        %v751 = vmul.f32 %v218, %v707
        %v752 = vmul.f32 %v219, %v710
        %v753 = vmul.f32 %v220, %v712
        %v754 = vmul.f32 %v221, %v715
        %v755 = vmul.f32 %v222, %v717
        %v756 = vmul.f32 %v223, %v720
        %v757 = vmul.f32 %v224, %v722
        %v758 = vmul.f32 %v225, %v725
        %v759 = vmul.f32 %v226, %v727
        %v760 = vsel %vm685, %v319, %v744
        %v761 = vsel %vm686, %v320, %v745
        %v762 = vsel %vm685, %v321, %v746
        %v763 = vsel %vm686, %v322, %v747
        %v764 = vsel %vm685, %v323, %v748
        %v765 = vsel %vm686, %v324, %v749
        %v766 = vsel %vm685, %v325, %v750
        %v767 = vsel %vm686, %v326, %v751
        %v768 = vsel %vm685, %v327, %v752
        %v769 = vsel %vm686, %v328, %v753
        %v770 = vsel %vm685, %v329, %v754
        %v771 = vsel %vm686, %v330, %v755
        %v772 = vsel %vm685, %v331, %v756
        %v773 = vsel %vm686, %v332, %v757
        %v774 = vsel %vm685, %v333, %v758
        %v775 = vsel %vm686, %v334, %v759
        %vm776 = vcmp.ge.s32.totalorder %v309, 3
        %vm777 = vcmp.ge.s32.totalorder %v310, 3
        %v778 = vsel %vm776, %v760, 0.0
        %v779 = vsel %vm777, %v761, 0.0
        %v780 = vsel %vm776, %v762, 0.0
        %v781 = vsel %vm777, %v763, 0.0
        %v782 = vsel %vm776, %v764, 0.0
        %v783 = vsel %vm777, %v765, 0.0
        %v784 = vsel %vm776, %v766, 0.0
        %v785 = vsel %vm777, %v767, 0.0
        %v786 = vsel %vm776, %v768, 0.0
        %v787 = vsel %vm777, %v769, 0.0
        %v788 = vsel %vm776, %v770, 0.0
        %v789 = vsel %vm777, %v771, 0.0
        %v790 = vsel %vm776, %v772, 0.0
        %v791 = vsel %vm777, %v773, 0.0
        %v792 = vsel %vm776, %v774, 0.0
        %v793 = vsel %vm777, %v775, 0.0
        %s794 = scalar_lea.vmem %s187, 384 [#allocation3]
        %795 = vst.msk [vmem:[%s794] sm:$0xff] %vm243, %v778
        %796 = vst.msk [vmem:[%s794 + $0x8] sm:$0xff] %vm243, %v779
        %797 = vst.msk [vmem:[%s794 + $0x10] sm:$0xff] %vm243, %v780
        %798 = vst.msk [vmem:[%s794 + $0x18] sm:$0xff] %vm243, %v781
        %799 = vst.msk [vmem:[%s794 + $0x20] sm:$0xff] %vm243, %v782
        %800 = vst.msk [vmem:[%s794 + $0x28] sm:$0xff] %vm243, %v783
        %801 = vst.msk [vmem:[%s794 + $0x30] sm:$0xff] %vm243, %v784
        %802 = vst.msk [vmem:[%s794 + $0x38] sm:$0xff] %vm243, %v785
        %803 = vst.msk [vmem:[%s794 + $0x40] sm:$0xff] %vm243, %v786
        %804 = vst.msk [vmem:[%s794 + $0x48] sm:$0xff] %vm243, %v787
        %805 = vst.msk [vmem:[%s794 + $0x50] sm:$0xff] %vm243, %v788
        %806 = vst.msk [vmem:[%s794 + $0x58] sm:$0xff] %vm243, %v789
        %807 = vst.msk [vmem:[%s794 + $0x60] sm:$0xff] %vm243, %v790
        %808 = vst.msk [vmem:[%s794 + $0x68] sm:$0xff] %vm243, %v791
        %809 = vst.msk [vmem:[%s794 + $0x70] sm:$0xff] %vm243, %v792
        %810 = vst.msk [vmem:[%s794 + $0x78] sm:$0xff] %vm243, %v793
        %v811 = vsub.s32 %v309, 4
        %v812 = vsub.s32 %v310, 4
        %vm813 = vcmp.ge.s32.totalorder %v811, 8
        %vm814 = vcmp.ge.s32.totalorder %v812, 8
        %vm815 = vcmask 1043456
        %v816 = vrot.slane %v284, 4
        %v817 = vrot.slane %v285, 4
        %v818 = vsel %vm815, %v816, %v817
        %v819 = vrot.slane %v286, 4
        %v820 = vsel %vm815, %v817, %v819
        %v821 = vrot.slane %v287, 4
        %v822 = vrot.slane %v288, 4
        %v823 = vsel %vm815, %v821, %v822
        %v824 = vrot.slane %v289, 4
        %v825 = vsel %vm815, %v822, %v824
        %v826 = vrot.slane %v290, 4
        %v827 = vrot.slane %v291, 4
        %v828 = vsel %vm815, %v826, %v827
        %v829 = vrot.slane %v292, 4
        %v830 = vsel %vm815, %v827, %v829
        %v831 = vrot.slane %v293, 4
        %v832 = vrot.slane %v294, 4
        %v833 = vsel %vm815, %v831, %v832
        %v834 = vrot.slane %v295, 4
        %v835 = vsel %vm815, %v832, %v834
        %v836 = vrot.slane %v296, 4
        %v837 = vrot.slane %v297, 4
        %v838 = vsel %vm815, %v836, %v837
        %v839 = vrot.slane %v298, 4
        %v840 = vsel %vm815, %v837, %v839
        %v841 = vrot.slane %v299, 4
        %v842 = vrot.slane %v300, 4
        %v843 = vsel %vm815, %v841, %v842
        %v844 = vrot.slane %v301, 4
        %v845 = vsel %vm815, %v842, %v844
        %v846 = vrot.slane %v302, 4
        %v847 = vrot.slane %v303, 4
        %v848 = vsel %vm815, %v846, %v847
        %v849 = vrot.slane %v304, 4
        %v850 = vsel %vm815, %v847, %v849
        %v851 = vrot.slane %v305, 4
        %v852 = vrot.slane %v306, 4
        %v853 = vsel %vm815, %v851, %v852
        %v854 = vrot.slane %v307, 4
        %v855 = vsel %vm815, %v852, %v854
        %v872 = vmul.f32 %v211, %v818
        %v873 = vmul.f32 %v212, %v820
        %v874 = vmul.f32 %v213, %v823
        %v875 = vmul.f32 %v214, %v825
        %v876 = vmul.f32 %v215, %v828
        %v877 = vmul.f32 %v216, %v830
        %v878 = vmul.f32 %v217, %v833
        %v879 = vmul.f32 %v218, %v835
        %v880 = vmul.f32 %v219, %v838
        %v881 = vmul.f32 %v220, %v840
        %v882 = vmul.f32 %v221, %v843
        %v883 = vmul.f32 %v222, %v845
        %v884 = vmul.f32 %v223, %v848
        %v885 = vmul.f32 %v224, %v850
        %v886 = vmul.f32 %v225, %v853
        %v887 = vmul.f32 %v226, %v855
        %v888 = vsel %vm813, %v319, %v872
        %v889 = vsel %vm814, %v320, %v873
        %v890 = vsel %vm813, %v321, %v874
        %v891 = vsel %vm814, %v322, %v875
        %v892 = vsel %vm813, %v323, %v876
        %v893 = vsel %vm814, %v324, %v877
        %v894 = vsel %vm813, %v325, %v878
        %v895 = vsel %vm814, %v326, %v879
        %v896 = vsel %vm813, %v327, %v880
        %v897 = vsel %vm814, %v328, %v881
        %v898 = vsel %vm813, %v329, %v882
        %v899 = vsel %vm814, %v330, %v883
        %v900 = vsel %vm813, %v331, %v884
        %v901 = vsel %vm814, %v332, %v885
        %v902 = vsel %vm813, %v333, %v886
        %v903 = vsel %vm814, %v334, %v887
        %vm904 = vcmp.ge.s32.totalorder %v309, 4
        %vm905 = vcmp.ge.s32.totalorder %v310, 4
        %v906 = vsel %vm904, %v888, 0.0
        %v907 = vsel %vm905, %v889, 0.0
        %v908 = vsel %vm904, %v890, 0.0
        %v909 = vsel %vm905, %v891, 0.0
        %v910 = vsel %vm904, %v892, 0.0
        %v911 = vsel %vm905, %v893, 0.0
        %v912 = vsel %vm904, %v894, 0.0
        %v913 = vsel %vm905, %v895, 0.0
        %v914 = vsel %vm904, %v896, 0.0
        %v915 = vsel %vm905, %v897, 0.0
        %v916 = vsel %vm904, %v898, 0.0
        %v917 = vsel %vm905, %v899, 0.0
        %v918 = vsel %vm904, %v900, 0.0
        %v919 = vsel %vm905, %v901, 0.0
        %v920 = vsel %vm904, %v902, 0.0
        %v921 = vsel %vm905, %v903, 0.0
        %s922 = scalar_lea.vmem %s187, 512 [#allocation3]
        %923 = vst.msk [vmem:[%s922] sm:$0xff] %vm243, %v906
        %924 = vst.msk [vmem:[%s922 + $0x8] sm:$0xff] %vm243, %v907
        %925 = vst.msk [vmem:[%s922 + $0x10] sm:$0xff] %vm243, %v908
        %926 = vst.msk [vmem:[%s922 + $0x18] sm:$0xff] %vm243, %v909
        %927 = vst.msk [vmem:[%s922 + $0x20] sm:$0xff] %vm243, %v910
        %928 = vst.msk [vmem:[%s922 + $0x28] sm:$0xff] %vm243, %v911
        %929 = vst.msk [vmem:[%s922 + $0x30] sm:$0xff] %vm243, %v912
        %930 = vst.msk [vmem:[%s922 + $0x38] sm:$0xff] %vm243, %v913
        %931 = vst.msk [vmem:[%s922 + $0x40] sm:$0xff] %vm243, %v914
        %932 = vst.msk [vmem:[%s922 + $0x48] sm:$0xff] %vm243, %v915
        %933 = vst.msk [vmem:[%s922 + $0x50] sm:$0xff] %vm243, %v916
        %934 = vst.msk [vmem:[%s922 + $0x58] sm:$0xff] %vm243, %v917
        %935 = vst.msk [vmem:[%s922 + $0x60] sm:$0xff] %vm243, %v918
        %936 = vst.msk [vmem:[%s922 + $0x68] sm:$0xff] %vm243, %v919
        %937 = vst.msk [vmem:[%s922 + $0x70] sm:$0xff] %vm243, %v920
        %938 = vst.msk [vmem:[%s922 + $0x78] sm:$0xff] %vm243, %v921
        %v939 = vsub.s32 %v309, 5
        %v940 = vsub.s32 %v310, 5
        %vm941 = vcmp.ge.s32.totalorder %v939, 8
        %vm942 = vcmp.ge.s32.totalorder %v940, 8
        %vm943 = vcmask 1044480
        %v944 = vrot.slane %v284, 3
        %v945 = vrot.slane %v285, 3
        %v946 = vsel %vm943, %v944, %v945
        %v947 = vrot.slane %v286, 3
        %v948 = vsel %vm943, %v945, %v947
        %v949 = vrot.slane %v287, 3
        %v950 = vrot.slane %v288, 3
        %v951 = vsel %vm943, %v949, %v950
        %v952 = vrot.slane %v289, 3
        %v953 = vsel %vm943, %v950, %v952
        %v954 = vrot.slane %v290, 3
        %v955 = vrot.slane %v291, 3
        %v956 = vsel %vm943, %v954, %v955
        %v957 = vrot.slane %v292, 3
        %v958 = vsel %vm943, %v955, %v957
        %v959 = vrot.slane %v293, 3
        %v960 = vrot.slane %v294, 3
        %v961 = vsel %vm943, %v959, %v960
        %v962 = vrot.slane %v295, 3
        %v963 = vsel %vm943, %v960, %v962
        %v964 = vrot.slane %v296, 3
        %v965 = vrot.slane %v297, 3
        %v966 = vsel %vm943, %v964, %v965
        %v967 = vrot.slane %v298, 3
        %v968 = vsel %vm943, %v965, %v967
        %v969 = vrot.slane %v299, 3
        %v970 = vrot.slane %v300, 3
        %v971 = vsel %vm943, %v969, %v970
        %v972 = vrot.slane %v301, 3
        %v973 = vsel %vm943, %v970, %v972
        %v974 = vrot.slane %v302, 3
        %v975 = vrot.slane %v303, 3
        %v976 = vsel %vm943, %v974, %v975
        %v977 = vrot.slane %v304, 3
        %v978 = vsel %vm943, %v975, %v977
        %v979 = vrot.slane %v305, 3
        %v980 = vrot.slane %v306, 3
        %v981 = vsel %vm943, %v979, %v980
        %v982 = vrot.slane %v307, 3
        %v983 = vsel %vm943, %v980, %v982
        %v1000 = vmul.f32 %v211, %v946
        %v1001 = vmul.f32 %v212, %v948
        %v1002 = vmul.f32 %v213, %v951
        %v1003 = vmul.f32 %v214, %v953
        %v1004 = vmul.f32 %v215, %v956
        %v1005 = vmul.f32 %v216, %v958
        %v1006 = vmul.f32 %v217, %v961
        %v1007 = vmul.f32 %v218, %v963
        %v1008 = vmul.f32 %v219, %v966
        %v1009 = vmul.f32 %v220, %v968
        %v1010 = vmul.f32 %v221, %v971
        %v1011 = vmul.f32 %v222, %v973
        %v1012 = vmul.f32 %v223, %v976
        %v1013 = vmul.f32 %v224, %v978
        %v1014 = vmul.f32 %v225, %v981
        %v1015 = vmul.f32 %v226, %v983
        %v1016 = vsel %vm941, %v319, %v1000
        %v1017 = vsel %vm942, %v320, %v1001
        %v1018 = vsel %vm941, %v321, %v1002
        %v1019 = vsel %vm942, %v322, %v1003
        %v1020 = vsel %vm941, %v323, %v1004
        %v1021 = vsel %vm942, %v324, %v1005
        %v1022 = vsel %vm941, %v325, %v1006
        %v1023 = vsel %vm942, %v326, %v1007
        %v1024 = vsel %vm941, %v327, %v1008
        %v1025 = vsel %vm942, %v328, %v1009
        %v1026 = vsel %vm941, %v329, %v1010
        %v1027 = vsel %vm942, %v330, %v1011
        %v1028 = vsel %vm941, %v331, %v1012
        %v1029 = vsel %vm942, %v332, %v1013
        %v1030 = vsel %vm941, %v333, %v1014
        %v1031 = vsel %vm942, %v334, %v1015
        %vm1032 = vcmp.ge.s32.totalorder %v309, 5
        %vm1033 = vcmp.ge.s32.totalorder %v310, 5
        %v1034 = vsel %vm1032, %v1016, 0.0
        %v1035 = vsel %vm1033, %v1017, 0.0
        %v1036 = vsel %vm1032, %v1018, 0.0
        %v1037 = vsel %vm1033, %v1019, 0.0
        %v1038 = vsel %vm1032, %v1020, 0.0
        %v1039 = vsel %vm1033, %v1021, 0.0
        %v1040 = vsel %vm1032, %v1022, 0.0
        %v1041 = vsel %vm1033, %v1023, 0.0
        %v1042 = vsel %vm1032, %v1024, 0.0
        %v1043 = vsel %vm1033, %v1025, 0.0
        %v1044 = vsel %vm1032, %v1026, 0.0
        %v1045 = vsel %vm1033, %v1027, 0.0
        %v1046 = vsel %vm1032, %v1028, 0.0
        %v1047 = vsel %vm1033, %v1029, 0.0
        %v1048 = vsel %vm1032, %v1030, 0.0
        %v1049 = vsel %vm1033, %v1031, 0.0
        %s1050 = scalar_lea.vmem %s187, 640 [#allocation3]
        %1051 = vst.msk [vmem:[%s1050] sm:$0xff] %vm243, %v1034
        %1052 = vst.msk [vmem:[%s1050 + $0x8] sm:$0xff] %vm243, %v1035
        %1053 = vst.msk [vmem:[%s1050 + $0x10] sm:$0xff] %vm243, %v1036
        %1054 = vst.msk [vmem:[%s1050 + $0x18] sm:$0xff] %vm243, %v1037
        %1055 = vst.msk [vmem:[%s1050 + $0x20] sm:$0xff] %vm243, %v1038
        %1056 = vst.msk [vmem:[%s1050 + $0x28] sm:$0xff] %vm243, %v1039
        %1057 = vst.msk [vmem:[%s1050 + $0x30] sm:$0xff] %vm243, %v1040
        %1058 = vst.msk [vmem:[%s1050 + $0x38] sm:$0xff] %vm243, %v1041
        %1059 = vst.msk [vmem:[%s1050 + $0x40] sm:$0xff] %vm243, %v1042
        %1060 = vst.msk [vmem:[%s1050 + $0x48] sm:$0xff] %vm243, %v1043
        %1061 = vst.msk [vmem:[%s1050 + $0x50] sm:$0xff] %vm243, %v1044
        %1062 = vst.msk [vmem:[%s1050 + $0x58] sm:$0xff] %vm243, %v1045
        %1063 = vst.msk [vmem:[%s1050 + $0x60] sm:$0xff] %vm243, %v1046
        %1064 = vst.msk [vmem:[%s1050 + $0x68] sm:$0xff] %vm243, %v1047
        %1065 = vst.msk [vmem:[%s1050 + $0x70] sm:$0xff] %vm243, %v1048
        %1066 = vst.msk [vmem:[%s1050 + $0x78] sm:$0xff] %vm243, %v1049
        %v1067 = vsub.s32 %v309, 6
        %v1068 = vsub.s32 %v310, 6
        %vm1069 = vcmp.ge.s32.totalorder %v1067, 8
        %vm1070 = vcmp.ge.s32.totalorder %v1068, 8
        %vm1071 = vcmask 1045504
        %v1072 = vrot.slane %v284, 2
        %v1073 = vrot.slane %v285, 2
        %v1074 = vsel %vm1071, %v1072, %v1073
        %v1075 = vrot.slane %v286, 2
        %v1076 = vsel %vm1071, %v1073, %v1075
        %v1077 = vrot.slane %v287, 2
        %v1078 = vrot.slane %v288, 2
        %v1079 = vsel %vm1071, %v1077, %v1078
        %v1080 = vrot.slane %v289, 2
        %v1081 = vsel %vm1071, %v1078, %v1080
        %v1082 = vrot.slane %v290, 2
        %v1083 = vrot.slane %v291, 2
        %v1084 = vsel %vm1071, %v1082, %v1083
        %v1085 = vrot.slane %v292, 2
        %v1086 = vsel %vm1071, %v1083, %v1085
        %v1087 = vrot.slane %v293, 2
        %v1088 = vrot.slane %v294, 2
        %v1089 = vsel %vm1071, %v1087, %v1088
        %v1090 = vrot.slane %v295, 2
        %v1091 = vsel %vm1071, %v1088, %v1090
        %v1092 = vrot.slane %v296, 2
        %v1093 = vrot.slane %v297, 2
        %v1094 = vsel %vm1071, %v1092, %v1093
        %v1095 = vrot.slane %v298, 2
        %v1096 = vsel %vm1071, %v1093, %v1095
        %v1097 = vrot.slane %v299, 2
        %v1098 = vrot.slane %v300, 2
        %v1099 = vsel %vm1071, %v1097, %v1098
        %v1100 = vrot.slane %v301, 2
        %v1101 = vsel %vm1071, %v1098, %v1100
        %v1102 = vrot.slane %v302, 2
        %v1103 = vrot.slane %v303, 2
        %v1104 = vsel %vm1071, %v1102, %v1103
        %v1105 = vrot.slane %v304, 2
        %v1106 = vsel %vm1071, %v1103, %v1105
        %v1107 = vrot.slane %v305, 2
        %v1108 = vrot.slane %v306, 2
        %v1109 = vsel %vm1071, %v1107, %v1108
        %v1110 = vrot.slane %v307, 2
        %v1111 = vsel %vm1071, %v1108, %v1110
        %v1128 = vmul.f32 %v211, %v1074
        %v1129 = vmul.f32 %v212, %v1076
        %v1130 = vmul.f32 %v213, %v1079
        %v1131 = vmul.f32 %v214, %v1081
        %v1132 = vmul.f32 %v215, %v1084
        %v1133 = vmul.f32 %v216, %v1086
        %v1134 = vmul.f32 %v217, %v1089
        %v1135 = vmul.f32 %v218, %v1091
        %v1136 = vmul.f32 %v219, %v1094
        %v1137 = vmul.f32 %v220, %v1096
        %v1138 = vmul.f32 %v221, %v1099
        %v1139 = vmul.f32 %v222, %v1101
        %v1140 = vmul.f32 %v223, %v1104
        %v1141 = vmul.f32 %v224, %v1106
        %v1142 = vmul.f32 %v225, %v1109
        %v1143 = vmul.f32 %v226, %v1111
        %v1144 = vsel %vm1069, %v319, %v1128
        %v1145 = vsel %vm1070, %v320, %v1129
        %v1146 = vsel %vm1069, %v321, %v1130
        %v1147 = vsel %vm1070, %v322, %v1131
        %v1148 = vsel %vm1069, %v323, %v1132
        %v1149 = vsel %vm1070, %v324, %v1133
        %v1150 = vsel %vm1069, %v325, %v1134
        %v1151 = vsel %vm1070, %v326, %v1135
        %v1152 = vsel %vm1069, %v327, %v1136
        %v1153 = vsel %vm1070, %v328, %v1137
        %v1154 = vsel %vm1069, %v329, %v1138
        %v1155 = vsel %vm1070, %v330, %v1139
        %v1156 = vsel %vm1069, %v331, %v1140
        %v1157 = vsel %vm1070, %v332, %v1141
        %v1158 = vsel %vm1069, %v333, %v1142
        %v1159 = vsel %vm1070, %v334, %v1143
        %vm1160 = vcmp.ge.s32.totalorder %v309, 6
        %vm1161 = vcmp.ge.s32.totalorder %v310, 6
        %v1162 = vsel %vm1160, %v1144, 0.0
        %v1163 = vsel %vm1161, %v1145, 0.0
        %v1164 = vsel %vm1160, %v1146, 0.0
        %v1165 = vsel %vm1161, %v1147, 0.0
        %v1166 = vsel %vm1160, %v1148, 0.0
        %v1167 = vsel %vm1161, %v1149, 0.0
        %v1168 = vsel %vm1160, %v1150, 0.0
        %v1169 = vsel %vm1161, %v1151, 0.0
        %v1170 = vsel %vm1160, %v1152, 0.0
        %v1171 = vsel %vm1161, %v1153, 0.0
        %v1172 = vsel %vm1160, %v1154, 0.0
        %v1173 = vsel %vm1161, %v1155, 0.0
        %v1174 = vsel %vm1160, %v1156, 0.0
        %v1175 = vsel %vm1161, %v1157, 0.0
        %v1176 = vsel %vm1160, %v1158, 0.0
        %v1177 = vsel %vm1161, %v1159, 0.0
        %s1178 = scalar_lea.vmem %s187, 768 [#allocation3]
        %1179 = vst.msk [vmem:[%s1178] sm:$0xff] %vm243, %v1162
        %1180 = vst.msk [vmem:[%s1178 + $0x8] sm:$0xff] %vm243, %v1163
        %1181 = vst.msk [vmem:[%s1178 + $0x10] sm:$0xff] %vm243, %v1164
        %1182 = vst.msk [vmem:[%s1178 + $0x18] sm:$0xff] %vm243, %v1165
        %1183 = vst.msk [vmem:[%s1178 + $0x20] sm:$0xff] %vm243, %v1166
        %1184 = vst.msk [vmem:[%s1178 + $0x28] sm:$0xff] %vm243, %v1167
        %1185 = vst.msk [vmem:[%s1178 + $0x30] sm:$0xff] %vm243, %v1168
        %1186 = vst.msk [vmem:[%s1178 + $0x38] sm:$0xff] %vm243, %v1169
        %1187 = vst.msk [vmem:[%s1178 + $0x40] sm:$0xff] %vm243, %v1170
        %1188 = vst.msk [vmem:[%s1178 + $0x48] sm:$0xff] %vm243, %v1171
        %1189 = vst.msk [vmem:[%s1178 + $0x50] sm:$0xff] %vm243, %v1172
        %1190 = vst.msk [vmem:[%s1178 + $0x58] sm:$0xff] %vm243, %v1173
        %1191 = vst.msk [vmem:[%s1178 + $0x60] sm:$0xff] %vm243, %v1174
        %1192 = vst.msk [vmem:[%s1178 + $0x68] sm:$0xff] %vm243, %v1175
        %1193 = vst.msk [vmem:[%s1178 + $0x70] sm:$0xff] %vm243, %v1176
        %1194 = vst.msk [vmem:[%s1178 + $0x78] sm:$0xff] %vm243, %v1177
        %v1195 = vsub.s32 %v309, 7
        %v1196 = vsub.s32 %v310, 7
        %vm1197 = vcmp.ge.s32.totalorder %v1195, 8
        %vm1198 = vcmp.ge.s32.totalorder %v1196, 8
        %vm1199 = vcmask 1046528
        %v1200 = vrot.slane %v284, 1
        %v1201 = vrot.slane %v285, 1
        %v1202 = vsel %vm1199, %v1200, %v1201
        %v1203 = vrot.slane %v286, 1
        %v1204 = vsel %vm1199, %v1201, %v1203
        %v1205 = vrot.slane %v287, 1
        %v1206 = vrot.slane %v288, 1
        %v1207 = vsel %vm1199, %v1205, %v1206
        %v1208 = vrot.slane %v289, 1
        %v1209 = vsel %vm1199, %v1206, %v1208
        %v1210 = vrot.slane %v290, 1
        %v1211 = vrot.slane %v291, 1
        %v1212 = vsel %vm1199, %v1210, %v1211
        %v1213 = vrot.slane %v292, 1
        %v1214 = vsel %vm1199, %v1211, %v1213
        %v1215 = vrot.slane %v293, 1
        %v1216 = vrot.slane %v294, 1
        %v1217 = vsel %vm1199, %v1215, %v1216
        %v1218 = vrot.slane %v295, 1
        %v1219 = vsel %vm1199, %v1216, %v1218
        %v1220 = vrot.slane %v296, 1
        %v1221 = vrot.slane %v297, 1
        %v1222 = vsel %vm1199, %v1220, %v1221
        %v1223 = vrot.slane %v298, 1
        %v1224 = vsel %vm1199, %v1221, %v1223
        %v1225 = vrot.slane %v299, 1
        %v1226 = vrot.slane %v300, 1
        %v1227 = vsel %vm1199, %v1225, %v1226
        %v1228 = vrot.slane %v301, 1
        %v1229 = vsel %vm1199, %v1226, %v1228
        %v1230 = vrot.slane %v302, 1
        %v1231 = vrot.slane %v303, 1
        %v1232 = vsel %vm1199, %v1230, %v1231
        %v1233 = vrot.slane %v304, 1
        %v1234 = vsel %vm1199, %v1231, %v1233
        %v1235 = vrot.slane %v305, 1
        %v1236 = vrot.slane %v306, 1
        %v1237 = vsel %vm1199, %v1235, %v1236
        %v1238 = vrot.slane %v307, 1
        %v1239 = vsel %vm1199, %v1236, %v1238
        %v1256 = vmul.f32 %v211, %v1202
        %v1257 = vmul.f32 %v212, %v1204
        %v1258 = vmul.f32 %v213, %v1207
        %v1259 = vmul.f32 %v214, %v1209
        %v1260 = vmul.f32 %v215, %v1212
        %v1261 = vmul.f32 %v216, %v1214
        %v1262 = vmul.f32 %v217, %v1217
        %v1263 = vmul.f32 %v218, %v1219
        %v1264 = vmul.f32 %v219, %v1222
        %v1265 = vmul.f32 %v220, %v1224
        %v1266 = vmul.f32 %v221, %v1227
        %v1267 = vmul.f32 %v222, %v1229
        %v1268 = vmul.f32 %v223, %v1232
        %v1269 = vmul.f32 %v224, %v1234
        %v1270 = vmul.f32 %v225, %v1237
        %v1271 = vmul.f32 %v226, %v1239
        %v1272 = vsel %vm1197, %v319, %v1256
        %v1273 = vsel %vm1198, %v320, %v1257
        %v1274 = vsel %vm1197, %v321, %v1258
        %v1275 = vsel %vm1198, %v322, %v1259
        %v1276 = vsel %vm1197, %v323, %v1260
        %v1277 = vsel %vm1198, %v324, %v1261
        %v1278 = vsel %vm1197, %v325, %v1262
        %v1279 = vsel %vm1198, %v326, %v1263
        %v1280 = vsel %vm1197, %v327, %v1264
        %v1281 = vsel %vm1198, %v328, %v1265
        %v1282 = vsel %vm1197, %v329, %v1266
        %v1283 = vsel %vm1198, %v330, %v1267
        %v1284 = vsel %vm1197, %v331, %v1268
        %v1285 = vsel %vm1198, %v332, %v1269
        %v1286 = vsel %vm1197, %v333, %v1270
        %v1287 = vsel %vm1198, %v334, %v1271
        %vm1288 = vcmp.ge.s32.totalorder %v309, 7
        %vm1289 = vcmp.ge.s32.totalorder %v310, 7
        %v1290 = vsel %vm1288, %v1272, 0.0
        %v1291 = vsel %vm1289, %v1273, 0.0
        %v1292 = vsel %vm1288, %v1274, 0.0
        %v1293 = vsel %vm1289, %v1275, 0.0
        %v1294 = vsel %vm1288, %v1276, 0.0
        %v1295 = vsel %vm1289, %v1277, 0.0
        %v1296 = vsel %vm1288, %v1278, 0.0
        %v1297 = vsel %vm1289, %v1279, 0.0
        %v1298 = vsel %vm1288, %v1280, 0.0
        %v1299 = vsel %vm1289, %v1281, 0.0
        %v1300 = vsel %vm1288, %v1282, 0.0
        %v1301 = vsel %vm1289, %v1283, 0.0
        %v1302 = vsel %vm1288, %v1284, 0.0
        %v1303 = vsel %vm1289, %v1285, 0.0
        %v1304 = vsel %vm1288, %v1286, 0.0
        %v1305 = vsel %vm1289, %v1287, 0.0
        %s1306 = scalar_lea.vmem %s187, 896 [#allocation3]
        %1307 = vst.msk [vmem:[%s1306] sm:$0xff] %vm243, %v1290
        %1308 = vst.msk [vmem:[%s1306 + $0x8] sm:$0xff] %vm243, %v1291
        %1309 = vst.msk [vmem:[%s1306 + $0x10] sm:$0xff] %vm243, %v1292
        %1310 = vst.msk [vmem:[%s1306 + $0x18] sm:$0xff] %vm243, %v1293
        %1311 = vst.msk [vmem:[%s1306 + $0x20] sm:$0xff] %vm243, %v1294
        %1312 = vst.msk [vmem:[%s1306 + $0x28] sm:$0xff] %vm243, %v1295
        %1313 = vst.msk [vmem:[%s1306 + $0x30] sm:$0xff] %vm243, %v1296
        %1314 = vst.msk [vmem:[%s1306 + $0x38] sm:$0xff] %vm243, %v1297
        %1315 = vst.msk [vmem:[%s1306 + $0x40] sm:$0xff] %vm243, %v1298
        %1316 = vst.msk [vmem:[%s1306 + $0x48] sm:$0xff] %vm243, %v1299
        %1317 = vst.msk [vmem:[%s1306 + $0x50] sm:$0xff] %vm243, %v1300
        %1318 = vst.msk [vmem:[%s1306 + $0x58] sm:$0xff] %vm243, %v1301
        %1319 = vst.msk [vmem:[%s1306 + $0x60] sm:$0xff] %vm243, %v1302
        %1320 = vst.msk [vmem:[%s1306 + $0x68] sm:$0xff] %vm243, %v1303
        %1321 = vst.msk [vmem:[%s1306 + $0x70] sm:$0xff] %vm243, %v1304
        %1322 = vst.msk [vmem:[%s1306 + $0x78] sm:$0xff] %vm243, %v1305
        %s1323 = sand.u32 %s91, 1
        %s1324 = sand.u32 %s91, 1
        %s1325 = smul.addr %s1324, 1024
        %s1326 = scalar_lea.vmem [#allocation3], %s1325
        // Predicated region
        $region29: #{tpu_custom_call.1} parent=27 // pred_check
          %p1327 = pneg %p101
        $region30: #{tpu_custom_call.1} parent=27 // pred_check_branch
          %1329 = sbr.rel (%p1327) target = $region32
        $region31: #{tpu_custom_call.1} parent=27 // pred_region
          %s1330 = smul.u32 8, %s18
          %s1331 = smul.addr %s1330, 2
          %s1332 = smul.addr %s17, 256
          %s1333 = sadd.s32 %s1331, %s1332
          %s1334 = smul.addr %s1333, 8
          %s1335 = scalar_lea.vmem %s2, %s1334
          // Predicated region
          $region33: #{tpu_custom_call.1} parent=31 // pred_check
            _
          $region34: #{tpu_custom_call.1} parent=31 // pred_check_branch
            %1337 = sbr.rel (0) target = $region36
          $region35: #{tpu_custom_call.1} parent=31 // pred_region
            // Predicated region
            $region37: #{tpu_custom_call.1} parent=35 // pred_check
              _
            $region38: #{tpu_custom_call.1} parent=35 // pred_check_branch
              %1339 = sbr.rel (0) target = $region40
            $region39: #{tpu_custom_call.1} parent=35 // pred_region
              // Predicated region
              $region52: #{tpu_custom_call.1} parent=39 // pred_check
                _
              $region53: #{tpu_custom_call.1} parent=39 // pred_check_branch
                %1609 = sbr.rel (0) target = $region55
              $region54: #{tpu_custom_call.1} parent=39 // pred_region
                loop: start=0, step=1, limit=1
                $region56: #{tpu_custom_call.1} parent=54 // loop_pre_header
                  _
                $region57: #{tpu_custom_call.1} parent=54 // loop_header
                  %s1611 = sphi 0, %s1615
                  %p1612 = scmp.ge.s32.totalorder %s1611, 1
                  %s1616 = sphi %s1326, %s1326
                  %s1617 = sphi %s1335, %s1335
                $region58: #{tpu_custom_call.1} parent=54 // loop_header_branch
                  %1614 = sbr.rel (%p1612) target = $region62
                $region59: #{tpu_custom_call.1} parent=54 // loop_body
                  %v1618 = vld [vmem:[%s1616] sm:$0xff]
                  %1619 = vst [vmem:[%s1617] sm:$0xff] %v1618
                  %v1620 = vld [vmem:[%s1616 + $0x8] sm:$0xff]
                  %1621 = vst [vmem:[%s1617 + $0x8] sm:$0xff] %v1620
                  %v1622 = vld [vmem:[%s1616 + $0x10] sm:$0xff]
                  %1623 = vst [vmem:[%s1617 + $0x10] sm:$0xff] %v1622
                  %v1624 = vld [vmem:[%s1616 + $0x18] sm:$0xff]
                  %1625 = vst [vmem:[%s1617 + $0x18] sm:$0xff] %v1624
                  %v1626 = vld [vmem:[%s1616 + $0x20] sm:$0xff]
                  %1627 = vst [vmem:[%s1617 + $0x20] sm:$0xff] %v1626
                  %v1628 = vld [vmem:[%s1616 + $0x28] sm:$0xff]
                  %1629 = vst [vmem:[%s1617 + $0x28] sm:$0xff] %v1628
                  %v1630 = vld [vmem:[%s1616 + $0x30] sm:$0xff]
                  %1631 = vst [vmem:[%s1617 + $0x30] sm:$0xff] %v1630
                  %v1632 = vld [vmem:[%s1616 + $0x38] sm:$0xff]
                  %1633 = vst [vmem:[%s1617 + $0x38] sm:$0xff] %v1632
                  %v1634 = vld [vmem:[%s1616 + $0x40] sm:$0xff]
                  %1635 = vst [vmem:[%s1617 + $0x40] sm:$0xff] %v1634
                  %v1636 = vld [vmem:[%s1616 + $0x48] sm:$0xff]
                  %1637 = vst [vmem:[%s1617 + $0x48] sm:$0xff] %v1636
                  %v1638 = vld [vmem:[%s1616 + $0x50] sm:$0xff]
                  %1639 = vst [vmem:[%s1617 + $0x50] sm:$0xff] %v1638
                  %v1640 = vld [vmem:[%s1616 + $0x58] sm:$0xff]
                  %1641 = vst [vmem:[%s1617 + $0x58] sm:$0xff] %v1640
                  %v1642 = vld [vmem:[%s1616 + $0x60] sm:$0xff]
                  %1643 = vst [vmem:[%s1617 + $0x60] sm:$0xff] %v1642
                  %v1644 = vld [vmem:[%s1616 + $0x68] sm:$0xff]
                  %1645 = vst [vmem:[%s1617 + $0x68] sm:$0xff] %v1644
                  %v1646 = vld [vmem:[%s1616 + $0x70] sm:$0xff]
                  %1647 = vst [vmem:[%s1617 + $0x70] sm:$0xff] %v1646
                  %v1648 = vld [vmem:[%s1616 + $0x78] sm:$0xff]
                  %1649 = vst [vmem:[%s1617 + $0x78] sm:$0xff] %v1648
                  %v1650 = vld [vmem:[%s1616 + $0x80] sm:$0xff]
                  %1651 = vst [vmem:[%s1617 + $0x100] sm:$0xff] %v1650
                  %v1652 = vld [vmem:[%s1616 + $0x88] sm:$0xff]
                  %1653 = vst [vmem:[%s1617 + $0x108] sm:$0xff] %v1652
                  %v1654 = vld [vmem:[%s1616 + $0x90] sm:$0xff]
                  %1655 = vst [vmem:[%s1617 + $0x110] sm:$0xff] %v1654
                  %v1656 = vld [vmem:[%s1616 + $0x98] sm:$0xff]
                  %1657 = vst [vmem:[%s1617 + $0x118] sm:$0xff] %v1656
                  %v1658 = vld [vmem:[%s1616 + $0xa0] sm:$0xff]
                  %1659 = vst [vmem:[%s1617 + $0x120] sm:$0xff] %v1658
                  %v1660 = vld [vmem:[%s1616 + $0xa8] sm:$0xff]
                  %1661 = vst [vmem:[%s1617 + $0x128] sm:$0xff] %v1660
                  %v1662 = vld [vmem:[%s1616 + $0xb0] sm:$0xff]
                  %1663 = vst [vmem:[%s1617 + $0x130] sm:$0xff] %v1662
                  %v1664 = vld [vmem:[%s1616 + $0xb8] sm:$0xff]
                  %1665 = vst [vmem:[%s1617 + $0x138] sm:$0xff] %v1664
                  %v1666 = vld [vmem:[%s1616 + $0xc0] sm:$0xff]
                  %1667 = vst [vmem:[%s1617 + $0x140] sm:$0xff] %v1666
                  %v1668 = vld [vmem:[%s1616 + $0xc8] sm:$0xff]
                  %1669 = vst [vmem:[%s1617 + $0x148] sm:$0xff] %v1668
                  %v1670 = vld [vmem:[%s1616 + $0xd0] sm:$0xff]
                  %1671 = vst [vmem:[%s1617 + $0x150] sm:$0xff] %v1670
                  %v1672 = vld [vmem:[%s1616 + $0xd8] sm:$0xff]
                  %1673 = vst [vmem:[%s1617 + $0x158] sm:$0xff] %v1672
                  %v1674 = vld [vmem:[%s1616 + $0xe0] sm:$0xff]
                  %1675 = vst [vmem:[%s1617 + $0x160] sm:$0xff] %v1674
                  %v1676 = vld [vmem:[%s1616 + $0xe8] sm:$0xff]
                  %1677 = vst [vmem:[%s1617 + $0x168] sm:$0xff] %v1676
                  %v1678 = vld [vmem:[%s1616 + $0xf0] sm:$0xff]
                  %1679 = vst [vmem:[%s1617 + $0x170] sm:$0xff] %v1678
                  %v1680 = vld [vmem:[%s1616 + $0xf8] sm:$0xff]
                  %1681 = vst [vmem:[%s1617 + $0x178] sm:$0xff] %v1680
                  %v1682 = vld [vmem:[%s1616 + $0x100] sm:$0xff]
                  %1683 = vst [vmem:[%s1617 + $0x200] sm:$0xff] %v1682
                  %v1684 = vld [vmem:[%s1616 + $0x108] sm:$0xff]
                  %1685 = vst [vmem:[%s1617 + $0x208] sm:$0xff] %v1684
                  %v1686 = vld [vmem:[%s1616 + $0x110] sm:$0xff]
                  %1687 = vst [vmem:[%s1617 + $0x210] sm:$0xff] %v1686
                  %v1688 = vld [vmem:[%s1616 + $0x118] sm:$0xff]
                  %1689 = vst [vmem:[%s1617 + $0x218] sm:$0xff] %v1688
                  %v1690 = vld [vmem:[%s1616 + $0x120] sm:$0xff]
                  %1691 = vst [vmem:[%s1617 + $0x220] sm:$0xff] %v1690
                  %v1692 = vld [vmem:[%s1616 + $0x128] sm:$0xff]
                  %1693 = vst [vmem:[%s1617 + $0x228] sm:$0xff] %v1692
                  %v1694 = vld [vmem:[%s1616 + $0x130] sm:$0xff]
                  %1695 = vst [vmem:[%s1617 + $0x230] sm:$0xff] %v1694
                  %v1696 = vld [vmem:[%s1616 + $0x138] sm:$0xff]
                  %1697 = vst [vmem:[%s1617 + $0x238] sm:$0xff] %v1696
                  %v1698 = vld [vmem:[%s1616 + $0x140] sm:$0xff]
                  %1699 = vst [vmem:[%s1617 + $0x240] sm:$0xff] %v1698
                  %v1700 = vld [vmem:[%s1616 + $0x148] sm:$0xff]
                  %1701 = vst [vmem:[%s1617 + $0x248] sm:$0xff] %v1700
                  %v1702 = vld [vmem:[%s1616 + $0x150] sm:$0xff]
                  %1703 = vst [vmem:[%s1617 + $0x250] sm:$0xff] %v1702
                  %v1704 = vld [vmem:[%s1616 + $0x158] sm:$0xff]
                  %1705 = vst [vmem:[%s1617 + $0x258] sm:$0xff] %v1704
                  %v1706 = vld [vmem:[%s1616 + $0x160] sm:$0xff]
                  %1707 = vst [vmem:[%s1617 + $0x260] sm:$0xff] %v1706
                  %v1708 = vld [vmem:[%s1616 + $0x168] sm:$0xff]
                  %1709 = vst [vmem:[%s1617 + $0x268] sm:$0xff] %v1708
                  %v1710 = vld [vmem:[%s1616 + $0x170] sm:$0xff]
                  %1711 = vst [vmem:[%s1617 + $0x270] sm:$0xff] %v1710
                  %v1712 = vld [vmem:[%s1616 + $0x178] sm:$0xff]
                  %1713 = vst [vmem:[%s1617 + $0x278] sm:$0xff] %v1712
                  %v1714 = vld [vmem:[%s1616 + $0x180] sm:$0xff]
                  %1715 = vst [vmem:[%s1617 + $0x300] sm:$0xff] %v1714
                  %v1716 = vld [vmem:[%s1616 + $0x188] sm:$0xff]
                  %1717 = vst [vmem:[%s1617 + $0x308] sm:$0xff] %v1716
                  %v1718 = vld [vmem:[%s1616 + $0x190] sm:$0xff]
                  %1719 = vst [vmem:[%s1617 + $0x310] sm:$0xff] %v1718
                  %v1720 = vld [vmem:[%s1616 + $0x198] sm:$0xff]
                  %1721 = vst [vmem:[%s1617 + $0x318] sm:$0xff] %v1720
                  %v1722 = vld [vmem:[%s1616 + $0x1a0] sm:$0xff]
                  %1723 = vst [vmem:[%s1617 + $0x320] sm:$0xff] %v1722
                  %v1724 = vld [vmem:[%s1616 + $0x1a8] sm:$0xff]
                  %1725 = vst [vmem:[%s1617 + $0x328] sm:$0xff] %v1724
                  %v1726 = vld [vmem:[%s1616 + $0x1b0] sm:$0xff]
                  %1727 = vst [vmem:[%s1617 + $0x330] sm:$0xff] %v1726
                  %v1728 = vld [vmem:[%s1616 + $0x1b8] sm:$0xff]
                  %1729 = vst [vmem:[%s1617 + $0x338] sm:$0xff] %v1728
                  %v1730 = vld [vmem:[%s1616 + $0x1c0] sm:$0xff]
                  %1731 = vst [vmem:[%s1617 + $0x340] sm:$0xff] %v1730
                  %v1732 = vld [vmem:[%s1616 + $0x1c8] sm:$0xff]
                  %1733 = vst [vmem:[%s1617 + $0x348] sm:$0xff] %v1732
                  %v1734 = vld [vmem:[%s1616 + $0x1d0] sm:$0xff]
                  %1735 = vst [vmem:[%s1617 + $0x350] sm:$0xff] %v1734
                  %v1736 = vld [vmem:[%s1616 + $0x1d8] sm:$0xff]
                  %1737 = vst [vmem:[%s1617 + $0x358] sm:$0xff] %v1736
                  %v1738 = vld [vmem:[%s1616 + $0x1e0] sm:$0xff]
                  %1739 = vst [vmem:[%s1617 + $0x360] sm:$0xff] %v1738
                  %v1740 = vld [vmem:[%s1616 + $0x1e8] sm:$0xff]
                  %1741 = vst [vmem:[%s1617 + $0x368] sm:$0xff] %v1740
                  %v1742 = vld [vmem:[%s1616 + $0x1f0] sm:$0xff]
                  %1743 = vst [vmem:[%s1617 + $0x370] sm:$0xff] %v1742
                  %v1744 = vld [vmem:[%s1616 + $0x1f8] sm:$0xff]
                  %1745 = vst [vmem:[%s1617 + $0x378] sm:$0xff] %v1744
                  %v1746 = vld [vmem:[%s1616 + $0x200] sm:$0xff]
                  %1747 = vst [vmem:[%s1617 + $0x400] sm:$0xff] %v1746
                  %v1748 = vld [vmem:[%s1616 + $0x208] sm:$0xff]
                  %1749 = vst [vmem:[%s1617 + $0x408] sm:$0xff] %v1748
                  %v1750 = vld [vmem:[%s1616 + $0x210] sm:$0xff]
                  %1751 = vst [vmem:[%s1617 + $0x410] sm:$0xff] %v1750
                  %v1752 = vld [vmem:[%s1616 + $0x218] sm:$0xff]
                  %1753 = vst [vmem:[%s1617 + $0x418] sm:$0xff] %v1752
                  %v1754 = vld [vmem:[%s1616 + $0x220] sm:$0xff]
                  %1755 = vst [vmem:[%s1617 + $0x420] sm:$0xff] %v1754
                  %v1756 = vld [vmem:[%s1616 + $0x228] sm:$0xff]
                  %1757 = vst [vmem:[%s1617 + $0x428] sm:$0xff] %v1756
                  %v1758 = vld [vmem:[%s1616 + $0x230] sm:$0xff]
                  %1759 = vst [vmem:[%s1617 + $0x430] sm:$0xff] %v1758
                  %v1760 = vld [vmem:[%s1616 + $0x238] sm:$0xff]
                  %1761 = vst [vmem:[%s1617 + $0x438] sm:$0xff] %v1760
                  %v1762 = vld [vmem:[%s1616 + $0x240] sm:$0xff]
                  %1763 = vst [vmem:[%s1617 + $0x440] sm:$0xff] %v1762
                  %v1764 = vld [vmem:[%s1616 + $0x248] sm:$0xff]
                  %1765 = vst [vmem:[%s1617 + $0x448] sm:$0xff] %v1764
                  %v1766 = vld [vmem:[%s1616 + $0x250] sm:$0xff]
                  %1767 = vst [vmem:[%s1617 + $0x450] sm:$0xff] %v1766
                  %v1768 = vld [vmem:[%s1616 + $0x258] sm:$0xff]
                  %1769 = vst [vmem:[%s1617 + $0x458] sm:$0xff] %v1768
                  %v1770 = vld [vmem:[%s1616 + $0x260] sm:$0xff]
                  %1771 = vst [vmem:[%s1617 + $0x460] sm:$0xff] %v1770
                  %v1772 = vld [vmem:[%s1616 + $0x268] sm:$0xff]
                  %1773 = vst [vmem:[%s1617 + $0x468] sm:$0xff] %v1772
                  %v1774 = vld [vmem:[%s1616 + $0x270] sm:$0xff]
                  %1775 = vst [vmem:[%s1617 + $0x470] sm:$0xff] %v1774
                  %v1776 = vld [vmem:[%s1616 + $0x278] sm:$0xff]
                  %1777 = vst [vmem:[%s1617 + $0x478] sm:$0xff] %v1776
                  %v1778 = vld [vmem:[%s1616 + $0x280] sm:$0xff]
                  %1779 = vst [vmem:[%s1617 + $0x500] sm:$0xff] %v1778
                  %v1780 = vld [vmem:[%s1616 + $0x288] sm:$0xff]
                  %1781 = vst [vmem:[%s1617 + $0x508] sm:$0xff] %v1780
                  %v1782 = vld [vmem:[%s1616 + $0x290] sm:$0xff]
                  %1783 = vst [vmem:[%s1617 + $0x510] sm:$0xff] %v1782
                  %v1784 = vld [vmem:[%s1616 + $0x298] sm:$0xff]
                  %1785 = vst [vmem:[%s1617 + $0x518] sm:$0xff] %v1784
                  %v1786 = vld [vmem:[%s1616 + $0x2a0] sm:$0xff]
                  %1787 = vst [vmem:[%s1617 + $0x520] sm:$0xff] %v1786
                  %v1788 = vld [vmem:[%s1616 + $0x2a8] sm:$0xff]
                  %1789 = vst [vmem:[%s1617 + $0x528] sm:$0xff] %v1788
                  %v1790 = vld [vmem:[%s1616 + $0x2b0] sm:$0xff]
                  %1791 = vst [vmem:[%s1617 + $0x530] sm:$0xff] %v1790
                  %v1792 = vld [vmem:[%s1616 + $0x2b8] sm:$0xff]
                  %1793 = vst [vmem:[%s1617 + $0x538] sm:$0xff] %v1792
                  %v1794 = vld [vmem:[%s1616 + $0x2c0] sm:$0xff]
                  %1795 = vst [vmem:[%s1617 + $0x540] sm:$0xff] %v1794
                  %v1796 = vld [vmem:[%s1616 + $0x2c8] sm:$0xff]
                  %1797 = vst [vmem:[%s1617 + $0x548] sm:$0xff] %v1796
                  %v1798 = vld [vmem:[%s1616 + $0x2d0] sm:$0xff]
                  %1799 = vst [vmem:[%s1617 + $0x550] sm:$0xff] %v1798
                  %v1800 = vld [vmem:[%s1616 + $0x2d8] sm:$0xff]
                  %1801 = vst [vmem:[%s1617 + $0x558] sm:$0xff] %v1800
                  %v1802 = vld [vmem:[%s1616 + $0x2e0] sm:$0xff]
                  %1803 = vst [vmem:[%s1617 + $0x560] sm:$0xff] %v1802
                  %v1804 = vld [vmem:[%s1616 + $0x2e8] sm:$0xff]
                  %1805 = vst [vmem:[%s1617 + $0x568] sm:$0xff] %v1804
                  %v1806 = vld [vmem:[%s1616 + $0x2f0] sm:$0xff]
                  %1807 = vst [vmem:[%s1617 + $0x570] sm:$0xff] %v1806
                  %v1808 = vld [vmem:[%s1616 + $0x2f8] sm:$0xff]
                  %1809 = vst [vmem:[%s1617 + $0x578] sm:$0xff] %v1808
                  %v1810 = vld [vmem:[%s1616 + $0x300] sm:$0xff]
                  %1811 = vst [vmem:[%s1617 + $0x600] sm:$0xff] %v1810
                  %v1812 = vld [vmem:[%s1616 + $0x308] sm:$0xff]
                  %1813 = vst [vmem:[%s1617 + $0x608] sm:$0xff] %v1812
                  %v1814 = vld [vmem:[%s1616 + $0x310] sm:$0xff]
                  %1815 = vst [vmem:[%s1617 + $0x610] sm:$0xff] %v1814
                  %v1816 = vld [vmem:[%s1616 + $0x318] sm:$0xff]
                  %1817 = vst [vmem:[%s1617 + $0x618] sm:$0xff] %v1816
                  %v1818 = vld [vmem:[%s1616 + $0x320] sm:$0xff]
                  %1819 = vst [vmem:[%s1617 + $0x620] sm:$0xff] %v1818
                  %v1820 = vld [vmem:[%s1616 + $0x328] sm:$0xff]
                  %1821 = vst [vmem:[%s1617 + $0x628] sm:$0xff] %v1820
                  %v1822 = vld [vmem:[%s1616 + $0x330] sm:$0xff]
                  %1823 = vst [vmem:[%s1617 + $0x630] sm:$0xff] %v1822
                  %v1824 = vld [vmem:[%s1616 + $0x338] sm:$0xff]
                  %1825 = vst [vmem:[%s1617 + $0x638] sm:$0xff] %v1824
                  %v1826 = vld [vmem:[%s1616 + $0x340] sm:$0xff]
                  %1827 = vst [vmem:[%s1617 + $0x640] sm:$0xff] %v1826
                  %v1828 = vld [vmem:[%s1616 + $0x348] sm:$0xff]
                  %1829 = vst [vmem:[%s1617 + $0x648] sm:$0xff] %v1828
                  %v1830 = vld [vmem:[%s1616 + $0x350] sm:$0xff]
                  %1831 = vst [vmem:[%s1617 + $0x650] sm:$0xff] %v1830
                  %v1832 = vld [vmem:[%s1616 + $0x358] sm:$0xff]
                  %1833 = vst [vmem:[%s1617 + $0x658] sm:$0xff] %v1832
                  %v1834 = vld [vmem:[%s1616 + $0x360] sm:$0xff]
                  %1835 = vst [vmem:[%s1617 + $0x660] sm:$0xff] %v1834
                  %v1836 = vld [vmem:[%s1616 + $0x368] sm:$0xff]
                  %1837 = vst [vmem:[%s1617 + $0x668] sm:$0xff] %v1836
                  %v1838 = vld [vmem:[%s1616 + $0x370] sm:$0xff]
                  %1839 = vst [vmem:[%s1617 + $0x670] sm:$0xff] %v1838
                  %v1840 = vld [vmem:[%s1616 + $0x378] sm:$0xff]
                  %1841 = vst [vmem:[%s1617 + $0x678] sm:$0xff] %v1840
                  %v1842 = vld [vmem:[%s1616 + $0x380] sm:$0xff]
                  %1843 = vst [vmem:[%s1617 + $0x700] sm:$0xff] %v1842
                  %v1844 = vld [vmem:[%s1616 + $0x388] sm:$0xff]
                  %1845 = vst [vmem:[%s1617 + $0x708] sm:$0xff] %v1844
                  %v1846 = vld [vmem:[%s1616 + $0x390] sm:$0xff]
                  %1847 = vst [vmem:[%s1617 + $0x710] sm:$0xff] %v1846
                  %v1848 = vld [vmem:[%s1616 + $0x398] sm:$0xff]
                  %1849 = vst [vmem:[%s1617 + $0x718] sm:$0xff] %v1848
                  %v1850 = vld [vmem:[%s1616 + $0x3a0] sm:$0xff]
                  %1851 = vst [vmem:[%s1617 + $0x720] sm:$0xff] %v1850
                  %v1852 = vld [vmem:[%s1616 + $0x3a8] sm:$0xff]
                  %1853 = vst [vmem:[%s1617 + $0x728] sm:$0xff] %v1852
                  %v1854 = vld [vmem:[%s1616 + $0x3b0] sm:$0xff]
                  %1855 = vst [vmem:[%s1617 + $0x730] sm:$0xff] %v1854
                  %v1856 = vld [vmem:[%s1616 + $0x3b8] sm:$0xff]
                  %1857 = vst [vmem:[%s1617 + $0x738] sm:$0xff] %v1856
                  %v1858 = vld [vmem:[%s1616 + $0x3c0] sm:$0xff]
                  %1859 = vst [vmem:[%s1617 + $0x740] sm:$0xff] %v1858
                  %v1860 = vld [vmem:[%s1616 + $0x3c8] sm:$0xff]
                  %1861 = vst [vmem:[%s1617 + $0x748] sm:$0xff] %v1860
                  %v1862 = vld [vmem:[%s1616 + $0x3d0] sm:$0xff]
                  %1863 = vst [vmem:[%s1617 + $0x750] sm:$0xff] %v1862
                  %v1864 = vld [vmem:[%s1616 + $0x3d8] sm:$0xff]
                  %1865 = vst [vmem:[%s1617 + $0x758] sm:$0xff] %v1864
                  %v1866 = vld [vmem:[%s1616 + $0x3e0] sm:$0xff]
                  %1867 = vst [vmem:[%s1617 + $0x760] sm:$0xff] %v1866
                  %v1868 = vld [vmem:[%s1616 + $0x3e8] sm:$0xff]
                  %1869 = vst [vmem:[%s1617 + $0x768] sm:$0xff] %v1868
                  %v1870 = vld [vmem:[%s1616 + $0x3f0] sm:$0xff]
                  %1871 = vst [vmem:[%s1617 + $0x770] sm:$0xff] %v1870
                  %v1872 = vld [vmem:[%s1616 + $0x3f8] sm:$0xff]
                  %1873 = vst [vmem:[%s1617 + $0x778] sm:$0xff] %v1872
                $region60: #{tpu_custom_call.1} parent=54 // loop_footer
                  %s1615 = sadd.s32 1, %s1611
                $region61: #{tpu_custom_call.1} parent=54 // loop_footer_branch
                  %1610 = sbr.rel target = $region57
                $region62: #{tpu_custom_call.1} parent=54 // loop_exit
                  _
              $region55: #{tpu_custom_call.1} parent=39 // pred_fallthru
                _
              // Predicated region
              $region63: #{tpu_custom_call.1} parent=39 // pred_check
                _
              $region64: #{tpu_custom_call.1} parent=39 // pred_check_branch
                %1875 = sbr.rel target = $region66
              $region65: #{tpu_custom_call.1} parent=39 // pred_region
                _
              $region66: #{tpu_custom_call.1} parent=39 // pred_fallthru
                _
            $region40: #{tpu_custom_call.1} parent=35 // pred_fallthru
              _
            // Predicated region
            $region41: #{tpu_custom_call.1} parent=35 // pred_check
              _
            $region42: #{tpu_custom_call.1} parent=35 // pred_check_branch
              %1341 = sbr.rel target = $region44
            $region43: #{tpu_custom_call.1} parent=35 // pred_region
              %s1343 = ssub.s32 256, 1
              loop: start=0, step=1, limit=1
              $region45: #{tpu_custom_call.1} parent=43 // loop_pre_header
                _
              $region46: #{tpu_custom_call.1} parent=43 // loop_header
                %s1345 = sphi 0, %s1349
                %p1346 = scmp.ge.s32.totalorder %s1345, 1
                %s1350 = sphi %s1326, %s1326
                %s1351 = sphi %s1335, %s1335
              $region47: #{tpu_custom_call.1} parent=43 // loop_header_branch
                %1348 = sbr.rel (%p1346) target = $region51
              $region48: #{tpu_custom_call.1} parent=43 // loop_body
                %v1352 = vld [vmem:[%s1350] sm:%s1343]
                %1353 = vst [vmem:[%s1351] sm:%s1343] %v1352
                %v1354 = vld [vmem:[%s1350 + $0x8] sm:%s1343]
                %1355 = vst [vmem:[%s1351 + $0x8] sm:%s1343] %v1354
                %v1356 = vld [vmem:[%s1350 + $0x10] sm:%s1343]
                %1357 = vst [vmem:[%s1351 + $0x10] sm:%s1343] %v1356
                %v1358 = vld [vmem:[%s1350 + $0x18] sm:%s1343]
                %1359 = vst [vmem:[%s1351 + $0x18] sm:%s1343] %v1358
                %v1360 = vld [vmem:[%s1350 + $0x20] sm:%s1343]
                %1361 = vst [vmem:[%s1351 + $0x20] sm:%s1343] %v1360
                %v1362 = vld [vmem:[%s1350 + $0x28] sm:%s1343]
                %1363 = vst [vmem:[%s1351 + $0x28] sm:%s1343] %v1362
                %v1364 = vld [vmem:[%s1350 + $0x30] sm:%s1343]
                %1365 = vst [vmem:[%s1351 + $0x30] sm:%s1343] %v1364
                %v1366 = vld [vmem:[%s1350 + $0x38] sm:%s1343]
                %1367 = vst [vmem:[%s1351 + $0x38] sm:%s1343] %v1366
                %v1368 = vld [vmem:[%s1350 + $0x40] sm:%s1343]
                %1369 = vst [vmem:[%s1351 + $0x40] sm:%s1343] %v1368
                %v1370 = vld [vmem:[%s1350 + $0x48] sm:%s1343]
                %1371 = vst [vmem:[%s1351 + $0x48] sm:%s1343] %v1370
                %v1372 = vld [vmem:[%s1350 + $0x50] sm:%s1343]
                %1373 = vst [vmem:[%s1351 + $0x50] sm:%s1343] %v1372
                %v1374 = vld [vmem:[%s1350 + $0x58] sm:%s1343]
                %1375 = vst [vmem:[%s1351 + $0x58] sm:%s1343] %v1374
                %v1376 = vld [vmem:[%s1350 + $0x60] sm:%s1343]
                %1377 = vst [vmem:[%s1351 + $0x60] sm:%s1343] %v1376
                %v1378 = vld [vmem:[%s1350 + $0x68] sm:%s1343]
                %1379 = vst [vmem:[%s1351 + $0x68] sm:%s1343] %v1378
                %v1380 = vld [vmem:[%s1350 + $0x70] sm:%s1343]
                %1381 = vst [vmem:[%s1351 + $0x70] sm:%s1343] %v1380
                %v1382 = vld [vmem:[%s1350 + $0x78] sm:%s1343]
                %1383 = vst [vmem:[%s1351 + $0x78] sm:%s1343] %v1382
                %v1384 = vld [vmem:[%s1350 + $0x80] sm:%s1343]
                %1385 = vst [vmem:[%s1351 + $0x100] sm:%s1343] %v1384
                %v1386 = vld [vmem:[%s1350 + $0x88] sm:%s1343]
                %1387 = vst [vmem:[%s1351 + $0x108] sm:%s1343] %v1386
                %v1388 = vld [vmem:[%s1350 + $0x90] sm:%s1343]
                %1389 = vst [vmem:[%s1351 + $0x110] sm:%s1343] %v1388
                %v1390 = vld [vmem:[%s1350 + $0x98] sm:%s1343]
                %1391 = vst [vmem:[%s1351 + $0x118] sm:%s1343] %v1390
                %v1392 = vld [vmem:[%s1350 + $0xa0] sm:%s1343]
                %1393 = vst [vmem:[%s1351 + $0x120] sm:%s1343] %v1392
                %v1394 = vld [vmem:[%s1350 + $0xa8] sm:%s1343]
                %1395 = vst [vmem:[%s1351 + $0x128] sm:%s1343] %v1394
                %v1396 = vld [vmem:[%s1350 + $0xb0] sm:%s1343]
                %1397 = vst [vmem:[%s1351 + $0x130] sm:%s1343] %v1396
                %v1398 = vld [vmem:[%s1350 + $0xb8] sm:%s1343]
                %1399 = vst [vmem:[%s1351 + $0x138] sm:%s1343] %v1398
                %v1400 = vld [vmem:[%s1350 + $0xc0] sm:%s1343]
                %1401 = vst [vmem:[%s1351 + $0x140] sm:%s1343] %v1400
                %v1402 = vld [vmem:[%s1350 + $0xc8] sm:%s1343]
                %1403 = vst [vmem:[%s1351 + $0x148] sm:%s1343] %v1402
                %v1404 = vld [vmem:[%s1350 + $0xd0] sm:%s1343]
                %1405 = vst [vmem:[%s1351 + $0x150] sm:%s1343] %v1404
                %v1406 = vld [vmem:[%s1350 + $0xd8] sm:%s1343]
                %1407 = vst [vmem:[%s1351 + $0x158] sm:%s1343] %v1406
                %v1408 = vld [vmem:[%s1350 + $0xe0] sm:%s1343]
                %1409 = vst [vmem:[%s1351 + $0x160] sm:%s1343] %v1408
                %v1410 = vld [vmem:[%s1350 + $0xe8] sm:%s1343]
                %1411 = vst [vmem:[%s1351 + $0x168] sm:%s1343] %v1410
                %v1412 = vld [vmem:[%s1350 + $0xf0] sm:%s1343]
                %1413 = vst [vmem:[%s1351 + $0x170] sm:%s1343] %v1412
                %v1414 = vld [vmem:[%s1350 + $0xf8] sm:%s1343]
                %1415 = vst [vmem:[%s1351 + $0x178] sm:%s1343] %v1414
                %v1416 = vld [vmem:[%s1350 + $0x100] sm:%s1343]
                %1417 = vst [vmem:[%s1351 + $0x200] sm:%s1343] %v1416
                %v1418 = vld [vmem:[%s1350 + $0x108] sm:%s1343]
                %1419 = vst [vmem:[%s1351 + $0x208] sm:%s1343] %v1418
                %v1420 = vld [vmem:[%s1350 + $0x110] sm:%s1343]
                %1421 = vst [vmem:[%s1351 + $0x210] sm:%s1343] %v1420
                %v1422 = vld [vmem:[%s1350 + $0x118] sm:%s1343]
                %1423 = vst [vmem:[%s1351 + $0x218] sm:%s1343] %v1422
                %v1424 = vld [vmem:[%s1350 + $0x120] sm:%s1343]
                %1425 = vst [vmem:[%s1351 + $0x220] sm:%s1343] %v1424
                %v1426 = vld [vmem:[%s1350 + $0x128] sm:%s1343]
                %1427 = vst [vmem:[%s1351 + $0x228] sm:%s1343] %v1426
                %v1428 = vld [vmem:[%s1350 + $0x130] sm:%s1343]
                %1429 = vst [vmem:[%s1351 + $0x230] sm:%s1343] %v1428
                %v1430 = vld [vmem:[%s1350 + $0x138] sm:%s1343]
                %1431 = vst [vmem:[%s1351 + $0x238] sm:%s1343] %v1430
                %v1432 = vld [vmem:[%s1350 + $0x140] sm:%s1343]
                %1433 = vst [vmem:[%s1351 + $0x240] sm:%s1343] %v1432
                %v1434 = vld [vmem:[%s1350 + $0x148] sm:%s1343]
                %1435 = vst [vmem:[%s1351 + $0x248] sm:%s1343] %v1434
                %v1436 = vld [vmem:[%s1350 + $0x150] sm:%s1343]
                %1437 = vst [vmem:[%s1351 + $0x250] sm:%s1343] %v1436
                %v1438 = vld [vmem:[%s1350 + $0x158] sm:%s1343]
                %1439 = vst [vmem:[%s1351 + $0x258] sm:%s1343] %v1438
                %v1440 = vld [vmem:[%s1350 + $0x160] sm:%s1343]
                %1441 = vst [vmem:[%s1351 + $0x260] sm:%s1343] %v1440
                %v1442 = vld [vmem:[%s1350 + $0x168] sm:%s1343]
                %1443 = vst [vmem:[%s1351 + $0x268] sm:%s1343] %v1442
                %v1444 = vld [vmem:[%s1350 + $0x170] sm:%s1343]
                %1445 = vst [vmem:[%s1351 + $0x270] sm:%s1343] %v1444
                %v1446 = vld [vmem:[%s1350 + $0x178] sm:%s1343]
                %1447 = vst [vmem:[%s1351 + $0x278] sm:%s1343] %v1446
                %v1448 = vld [vmem:[%s1350 + $0x180] sm:%s1343]
                %1449 = vst [vmem:[%s1351 + $0x300] sm:%s1343] %v1448
                %v1450 = vld [vmem:[%s1350 + $0x188] sm:%s1343]
                %1451 = vst [vmem:[%s1351 + $0x308] sm:%s1343] %v1450
                %v1452 = vld [vmem:[%s1350 + $0x190] sm:%s1343]
                %1453 = vst [vmem:[%s1351 + $0x310] sm:%s1343] %v1452
                %v1454 = vld [vmem:[%s1350 + $0x198] sm:%s1343]
                %1455 = vst [vmem:[%s1351 + $0x318] sm:%s1343] %v1454
                %v1456 = vld [vmem:[%s1350 + $0x1a0] sm:%s1343]
                %1457 = vst [vmem:[%s1351 + $0x320] sm:%s1343] %v1456
                %v1458 = vld [vmem:[%s1350 + $0x1a8] sm:%s1343]
                %1459 = vst [vmem:[%s1351 + $0x328] sm:%s1343] %v1458
                %v1460 = vld [vmem:[%s1350 + $0x1b0] sm:%s1343]
                %1461 = vst [vmem:[%s1351 + $0x330] sm:%s1343] %v1460
                %v1462 = vld [vmem:[%s1350 + $0x1b8] sm:%s1343]
                %1463 = vst [vmem:[%s1351 + $0x338] sm:%s1343] %v1462
                %v1464 = vld [vmem:[%s1350 + $0x1c0] sm:%s1343]
                %1465 = vst [vmem:[%s1351 + $0x340] sm:%s1343] %v1464
                %v1466 = vld [vmem:[%s1350 + $0x1c8] sm:%s1343]
                %1467 = vst [vmem:[%s1351 + $0x348] sm:%s1343] %v1466
                %v1468 = vld [vmem:[%s1350 + $0x1d0] sm:%s1343]
                %1469 = vst [vmem:[%s1351 + $0x350] sm:%s1343] %v1468
                %v1470 = vld [vmem:[%s1350 + $0x1d8] sm:%s1343]
                %1471 = vst [vmem:[%s1351 + $0x358] sm:%s1343] %v1470
                %v1472 = vld [vmem:[%s1350 + $0x1e0] sm:%s1343]
                %1473 = vst [vmem:[%s1351 + $0x360] sm:%s1343] %v1472
                %v1474 = vld [vmem:[%s1350 + $0x1e8] sm:%s1343]
                %1475 = vst [vmem:[%s1351 + $0x368] sm:%s1343] %v1474
                %v1476 = vld [vmem:[%s1350 + $0x1f0] sm:%s1343]
                %1477 = vst [vmem:[%s1351 + $0x370] sm:%s1343] %v1476
                %v1478 = vld [vmem:[%s1350 + $0x1f8] sm:%s1343]
                %1479 = vst [vmem:[%s1351 + $0x378] sm:%s1343] %v1478
                %v1480 = vld [vmem:[%s1350 + $0x200] sm:%s1343]
                %1481 = vst [vmem:[%s1351 + $0x400] sm:%s1343] %v1480
                %v1482 = vld [vmem:[%s1350 + $0x208] sm:%s1343]
                %1483 = vst [vmem:[%s1351 + $0x408] sm:%s1343] %v1482
                %v1484 = vld [vmem:[%s1350 + $0x210] sm:%s1343]
                %1485 = vst [vmem:[%s1351 + $0x410] sm:%s1343] %v1484
                %v1486 = vld [vmem:[%s1350 + $0x218] sm:%s1343]
                %1487 = vst [vmem:[%s1351 + $0x418] sm:%s1343] %v1486
                %v1488 = vld [vmem:[%s1350 + $0x220] sm:%s1343]
                %1489 = vst [vmem:[%s1351 + $0x420] sm:%s1343] %v1488
                %v1490 = vld [vmem:[%s1350 + $0x228] sm:%s1343]
                %1491 = vst [vmem:[%s1351 + $0x428] sm:%s1343] %v1490
                %v1492 = vld [vmem:[%s1350 + $0x230] sm:%s1343]
                %1493 = vst [vmem:[%s1351 + $0x430] sm:%s1343] %v1492
                %v1494 = vld [vmem:[%s1350 + $0x238] sm:%s1343]
                %1495 = vst [vmem:[%s1351 + $0x438] sm:%s1343] %v1494
                %v1496 = vld [vmem:[%s1350 + $0x240] sm:%s1343]
                %1497 = vst [vmem:[%s1351 + $0x440] sm:%s1343] %v1496
                %v1498 = vld [vmem:[%s1350 + $0x248] sm:%s1343]
                %1499 = vst [vmem:[%s1351 + $0x448] sm:%s1343] %v1498
                %v1500 = vld [vmem:[%s1350 + $0x250] sm:%s1343]
                %1501 = vst [vmem:[%s1351 + $0x450] sm:%s1343] %v1500
                %v1502 = vld [vmem:[%s1350 + $0x258] sm:%s1343]
                %1503 = vst [vmem:[%s1351 + $0x458] sm:%s1343] %v1502
                %v1504 = vld [vmem:[%s1350 + $0x260] sm:%s1343]
                %1505 = vst [vmem:[%s1351 + $0x460] sm:%s1343] %v1504
                %v1506 = vld [vmem:[%s1350 + $0x268] sm:%s1343]
                %1507 = vst [vmem:[%s1351 + $0x468] sm:%s1343] %v1506
                %v1508 = vld [vmem:[%s1350 + $0x270] sm:%s1343]
                %1509 = vst [vmem:[%s1351 + $0x470] sm:%s1343] %v1508
                %v1510 = vld [vmem:[%s1350 + $0x278] sm:%s1343]
                %1511 = vst [vmem:[%s1351 + $0x478] sm:%s1343] %v1510
                %v1512 = vld [vmem:[%s1350 + $0x280] sm:%s1343]
                %1513 = vst [vmem:[%s1351 + $0x500] sm:%s1343] %v1512
                %v1514 = vld [vmem:[%s1350 + $0x288] sm:%s1343]
                %1515 = vst [vmem:[%s1351 + $0x508] sm:%s1343] %v1514
                %v1516 = vld [vmem:[%s1350 + $0x290] sm:%s1343]
                %1517 = vst [vmem:[%s1351 + $0x510] sm:%s1343] %v1516
                %v1518 = vld [vmem:[%s1350 + $0x298] sm:%s1343]
                %1519 = vst [vmem:[%s1351 + $0x518] sm:%s1343] %v1518
                %v1520 = vld [vmem:[%s1350 + $0x2a0] sm:%s1343]
                %1521 = vst [vmem:[%s1351 + $0x520] sm:%s1343] %v1520
                %v1522 = vld [vmem:[%s1350 + $0x2a8] sm:%s1343]
                %1523 = vst [vmem:[%s1351 + $0x528] sm:%s1343] %v1522
                %v1524 = vld [vmem:[%s1350 + $0x2b0] sm:%s1343]
                %1525 = vst [vmem:[%s1351 + $0x530] sm:%s1343] %v1524
                %v1526 = vld [vmem:[%s1350 + $0x2b8] sm:%s1343]
                %1527 = vst [vmem:[%s1351 + $0x538] sm:%s1343] %v1526
                %v1528 = vld [vmem:[%s1350 + $0x2c0] sm:%s1343]
                %1529 = vst [vmem:[%s1351 + $0x540] sm:%s1343] %v1528
                %v1530 = vld [vmem:[%s1350 + $0x2c8] sm:%s1343]
                %1531 = vst [vmem:[%s1351 + $0x548] sm:%s1343] %v1530
                %v1532 = vld [vmem:[%s1350 + $0x2d0] sm:%s1343]
                %1533 = vst [vmem:[%s1351 + $0x550] sm:%s1343] %v1532
                %v1534 = vld [vmem:[%s1350 + $0x2d8] sm:%s1343]
                %1535 = vst [vmem:[%s1351 + $0x558] sm:%s1343] %v1534
                %v1536 = vld [vmem:[%s1350 + $0x2e0] sm:%s1343]
                %1537 = vst [vmem:[%s1351 + $0x560] sm:%s1343] %v1536
                %v1538 = vld [vmem:[%s1350 + $0x2e8] sm:%s1343]
                %1539 = vst [vmem:[%s1351 + $0x568] sm:%s1343] %v1538
                %v1540 = vld [vmem:[%s1350 + $0x2f0] sm:%s1343]
                %1541 = vst [vmem:[%s1351 + $0x570] sm:%s1343] %v1540
                %v1542 = vld [vmem:[%s1350 + $0x2f8] sm:%s1343]
                %1543 = vst [vmem:[%s1351 + $0x578] sm:%s1343] %v1542
                %v1544 = vld [vmem:[%s1350 + $0x300] sm:%s1343]
                %1545 = vst [vmem:[%s1351 + $0x600] sm:%s1343] %v1544
                %v1546 = vld [vmem:[%s1350 + $0x308] sm:%s1343]
                %1547 = vst [vmem:[%s1351 + $0x608] sm:%s1343] %v1546
                %v1548 = vld [vmem:[%s1350 + $0x310] sm:%s1343]
                %1549 = vst [vmem:[%s1351 + $0x610] sm:%s1343] %v1548
                %v1550 = vld [vmem:[%s1350 + $0x318] sm:%s1343]
                %1551 = vst [vmem:[%s1351 + $0x618] sm:%s1343] %v1550
                %v1552 = vld [vmem:[%s1350 + $0x320] sm:%s1343]
                %1553 = vst [vmem:[%s1351 + $0x620] sm:%s1343] %v1552
                %v1554 = vld [vmem:[%s1350 + $0x328] sm:%s1343]
                %1555 = vst [vmem:[%s1351 + $0x628] sm:%s1343] %v1554
                %v1556 = vld [vmem:[%s1350 + $0x330] sm:%s1343]
                %1557 = vst [vmem:[%s1351 + $0x630] sm:%s1343] %v1556
                %v1558 = vld [vmem:[%s1350 + $0x338] sm:%s1343]
                %1559 = vst [vmem:[%s1351 + $0x638] sm:%s1343] %v1558
                %v1560 = vld [vmem:[%s1350 + $0x340] sm:%s1343]
                %1561 = vst [vmem:[%s1351 + $0x640] sm:%s1343] %v1560
                %v1562 = vld [vmem:[%s1350 + $0x348] sm:%s1343]
                %1563 = vst [vmem:[%s1351 + $0x648] sm:%s1343] %v1562
                %v1564 = vld [vmem:[%s1350 + $0x350] sm:%s1343]
                %1565 = vst [vmem:[%s1351 + $0x650] sm:%s1343] %v1564
                %v1566 = vld [vmem:[%s1350 + $0x358] sm:%s1343]
                %1567 = vst [vmem:[%s1351 + $0x658] sm:%s1343] %v1566
                %v1568 = vld [vmem:[%s1350 + $0x360] sm:%s1343]
                %1569 = vst [vmem:[%s1351 + $0x660] sm:%s1343] %v1568
                %v1570 = vld [vmem:[%s1350 + $0x368] sm:%s1343]
                %1571 = vst [vmem:[%s1351 + $0x668] sm:%s1343] %v1570
                %v1572 = vld [vmem:[%s1350 + $0x370] sm:%s1343]
                %1573 = vst [vmem:[%s1351 + $0x670] sm:%s1343] %v1572
                %v1574 = vld [vmem:[%s1350 + $0x378] sm:%s1343]
                %1575 = vst [vmem:[%s1351 + $0x678] sm:%s1343] %v1574
                %v1576 = vld [vmem:[%s1350 + $0x380] sm:%s1343]
                %1577 = vst [vmem:[%s1351 + $0x700] sm:%s1343] %v1576
                %v1578 = vld [vmem:[%s1350 + $0x388] sm:%s1343]
                %1579 = vst [vmem:[%s1351 + $0x708] sm:%s1343] %v1578
                %v1580 = vld [vmem:[%s1350 + $0x390] sm:%s1343]
                %1581 = vst [vmem:[%s1351 + $0x710] sm:%s1343] %v1580
                %v1582 = vld [vmem:[%s1350 + $0x398] sm:%s1343]
                %1583 = vst [vmem:[%s1351 + $0x718] sm:%s1343] %v1582
                %v1584 = vld [vmem:[%s1350 + $0x3a0] sm:%s1343]
                %1585 = vst [vmem:[%s1351 + $0x720] sm:%s1343] %v1584
                %v1586 = vld [vmem:[%s1350 + $0x3a8] sm:%s1343]
                %1587 = vst [vmem:[%s1351 + $0x728] sm:%s1343] %v1586
                %v1588 = vld [vmem:[%s1350 + $0x3b0] sm:%s1343]
                %1589 = vst [vmem:[%s1351 + $0x730] sm:%s1343] %v1588
                %v1590 = vld [vmem:[%s1350 + $0x3b8] sm:%s1343]
                %1591 = vst [vmem:[%s1351 + $0x738] sm:%s1343] %v1590
                %v1592 = vld [vmem:[%s1350 + $0x3c0] sm:%s1343]
                %1593 = vst [vmem:[%s1351 + $0x740] sm:%s1343] %v1592
                %v1594 = vld [vmem:[%s1350 + $0x3c8] sm:%s1343]
                %1595 = vst [vmem:[%s1351 + $0x748] sm:%s1343] %v1594
                %v1596 = vld [vmem:[%s1350 + $0x3d0] sm:%s1343]
                %1597 = vst [vmem:[%s1351 + $0x750] sm:%s1343] %v1596
                %v1598 = vld [vmem:[%s1350 + $0x3d8] sm:%s1343]
                %1599 = vst [vmem:[%s1351 + $0x758] sm:%s1343] %v1598
                %v1600 = vld [vmem:[%s1350 + $0x3e0] sm:%s1343]
                %1601 = vst [vmem:[%s1351 + $0x760] sm:%s1343] %v1600
                %v1602 = vld [vmem:[%s1350 + $0x3e8] sm:%s1343]
                %1603 = vst [vmem:[%s1351 + $0x768] sm:%s1343] %v1602
                %v1604 = vld [vmem:[%s1350 + $0x3f0] sm:%s1343]
                %1605 = vst [vmem:[%s1351 + $0x770] sm:%s1343] %v1604
                %v1606 = vld [vmem:[%s1350 + $0x3f8] sm:%s1343]
                %1607 = vst [vmem:[%s1351 + $0x778] sm:%s1343] %v1606
              $region49: #{tpu_custom_call.1} parent=43 // loop_footer
                %s1349 = sadd.s32 1, %s1345
              $region50: #{tpu_custom_call.1} parent=43 // loop_footer_branch
                %1344 = sbr.rel target = $region46
              $region51: #{tpu_custom_call.1} parent=43 // loop_exit
                _
            $region44: #{tpu_custom_call.1} parent=35 // pred_fallthru
              _
          $region36: #{tpu_custom_call.1} parent=31 // pred_fallthru
            _
          %1876 = vnop
        $region32: #{tpu_custom_call.1} parent=27 // pred_fallthru
          _
      $region28: #{tpu_custom_call.1} parent=5 // pred_fallthru
        _
      %p1877 = scmp.le.s32.totalorder 2, %s8
      // Predicated region
      $region67: #{tpu_custom_call.1} parent=5 // pred_check
        %p1878 = pneg %p1877
      $region68: #{tpu_custom_call.1} parent=5 // pred_check_branch
        %1880 = sbr.rel (%p1878) target = $region70
      $region69: #{tpu_custom_call.1} parent=5 // pred_region
        %s1881 = ssub.s32 %s8, 2
        // Predicated region
        $region71: #{tpu_custom_call.1} parent=69 // pred_check
          %p1882 = pneg %p107
        $region72: #{tpu_custom_call.1} parent=69 // pred_check_branch
          %1884 = sbr.rel (%p1882) target = $region74
        $region73: #{tpu_custom_call.1} parent=69 // pred_region
          %s1885 = sand.u32 %s92, 1
          %s1886 = sand.u32 %s92, 1
          %s1887 = smul.addr %s1886, 1024
          %s1888 = scalar_lea.vmem [#allocation3], %s1887
        $region74: #{tpu_custom_call.1} parent=69 // pred_fallthru
          _
      $region70: #{tpu_custom_call.1} parent=5 // pred_fallthru
        _
    $region6: #{tpu_custom_call.1} parent=1 // loop_footer
      %s12 = sadd.s32 1, %s8
    $region7: #{tpu_custom_call.1} parent=1 // loop_footer_branch
      %7 = sbr.rel target = $region3
    $region8: #{tpu_custom_call.1} parent=1 // loop_exit
      _

</llo_original>
